<compile_context>
chip_gen: v6e
topology: v6e:2x2x1
jax: 0.10.0
libtpu: 0.0.40
codegen_flags: <defaults>
</compile_context>

<pallas_src>
import functools
import math

import jax
import jax.numpy as jnp
from jax.experimental import pallas as pl
from jax.experimental.pallas import tpu as pltpu


# ----------------------------------------------------------------------------
# Kernel 1: fused nn.Linear + split_heads.
#   y[h, m, c] == (x @ W^T + b)[m, h*depth + c], written head-major.
# ----------------------------------------------------------------------------
def _head_proj_kernel(x_ref, w_ref, b_ref, o_ref):
    # x_ref: (tm, Din); w_ref: (1, Din, depth); b_ref: (1, 1, depth)
    y = jax.lax.dot_general(
        x_ref[...], w_ref[0],
        dimension_numbers=(((1,), (0,)), ((), ())),
        preferred_element_type=jnp.float32)              # (tm, depth)
    o_ref[0] = (y + b_ref[0].astype(jnp.float32)).astype(o_ref.dtype)


def head_projection(x2d, w, b, num_heads, *, block_m=256):
    """x2d: (M, Din), w: (Dout, Din) torch layout, b: (Dout,).

    Returns head-major (H, M, depth).  The row axis streams through VMEM in
    `block_m` tiles (ragged last tile handled by masked writes); only a
    (Din, depth) weight slice is resident per step.  Heads are the innermost
    grid axis so each x row-tile is DMA'd once and reused across all heads.
    block_m: 256 is safe everywhere; sweep toward 512 on v5e/v6e (128 MiB VMEM).
    """
    M, Din = x2d.shape
    Dout = w.shape[0]
    depth = Dout // num_heads
    # One-time weight re-arrangement (amortized over all tiles / calls):
    # (Dout, Din) -> (H, Din, depth) so the kernel does a plain (M,K)x(K,N) dot.
    w_hm = w.reshape(num_heads, depth, Din).transpose(0, 2, 1)
    b_hm = b.reshape(num_heads, 1, depth)

    tm = min(block_m, M)
    grid = (pl.cdiv(M, tm), num_heads)
    return pl.pallas_call(
        _head_proj_kernel,
        out_shape=jax.ShapeDtypeStruct((num_heads, M, depth), x2d.dtype),
        grid=grid,
        in_specs=[
            pl.BlockSpec((tm, Din), lambda i, h: (i, 0)),
            pl.BlockSpec((1, Din, depth), lambda i, h: (h, 0, 0)),
            pl.BlockSpec((1, 1, depth), lambda i, h: (h, 0, 0)),
        ],
        out_specs=pl.BlockSpec((1, tm, depth), lambda i, h: (h, i, 0)),
        compiler_params=pltpu.CompilerParams(
            dimension_semantics=("parallel", "parallel")),
    )(x2d, w_hm, b_hm)


# ----------------------------------------------------------------------------
# Kernel 2: scaled-dot-product attention, one (batch, head) pair per step.
# Q/K/V arrive head-major (H, B*S, depth); per-step VMEM is S*depth blocks
# plus one (Sq, Sk) score/weight block.
# ----------------------------------------------------------------------------
def _attention_kernel(q_ref, k_ref, v_ref, o_ref, w_ref, *, scale):
    q = q_ref[0].astype(jnp.float32) * scale   # fold 1/sqrt(depth) in f32
    k = k_ref[0]                                # (Sk, depth)
    v = v_ref[0]                                # (Sk, depth)

    # scores = q @ k^T (contract the shared depth dim; no explicit transpose).
    scores = jax.lax.dot_general(
        q, k, dimension_numbers=(((1,), (1,)), ((), ())),
        preferred_element_type=jnp.float32)     # (Sq, Sk)

    # Numerically-stable softmax; exact division because the weights are a
    # module-visible output (no approx reciprocal on returned data).
    m = jnp.max(scores, axis=-1, keepdims=True)
    e = jnp.exp(scores - m)
    denom = jnp.sum(e, axis=-1, keepdims=True)
    attn = e / denom

    w_ref[0, 0] = attn.astype(w_ref.dtype)

    # PV matmul in the input dtype, f32 accumulation; single lane-dense store.
    out = jnp.dot(attn.astype(v.dtype), v, preferred_element_type=jnp.float32)
    o_ref[0] = out.astype(o_ref.dtype)


def attention(q_hm, k_hm, v_hm, *, batch, q_len, kv_len):
    """q_hm: (H, B*Sq, depth); k_hm/v_hm: (H, B*Sk, depth) head-major.
    Returns (attn_out head-major (H, B*Sq, depth), attn_weights (B,H,Sq,Sk))."""
    num_heads, _, depth = q_hm.shape
    scale = 1.0 / math.sqrt(depth)
    kernel = functools.partial(_attention_kernel, scale=scale)
    return pl.pallas_call(
        kernel,
        out_shape=(
            jax.ShapeDtypeStruct((num_heads, batch * q_len, depth), q_hm.dtype),
            jax.ShapeDtypeStruct((batch, num_heads, q_len, kv_len), q_hm.dtype),
        ),
        grid=(batch, num_heads),
        in_specs=[
            pl.BlockSpec((1, q_len, depth), lambda b, h: (h, b, 0)),
            pl.BlockSpec((1, kv_len, depth), lambda b, h: (h, b, 0)),
            pl.BlockSpec((1, kv_len, depth), lambda b, h: (h, b, 0)),
        ],
        out_specs=(
            pl.BlockSpec((1, q_len, depth), lambda b, h: (h, b, 0)),
            pl.BlockSpec((1, 1, q_len, kv_len), lambda b, h: (b, h, 0, 0)),
        ),
        compiler_params=pltpu.CompilerParams(
            dimension_semantics=("parallel", "parallel")),
    )(q_hm, k_hm, v_hm)


# ----------------------------------------------------------------------------
# Kernel 3: fused merge-heads + output projection (the folded double-dense).
# The head axis is the contraction grid axis; (M, Dout) are cdiv-tiled, so the
# full (Dout, Din) weight never sits in VMEM (only a (depth, tn) slice).
# ----------------------------------------------------------------------------
def _merge_dense_kernel(x_ref, w_ref, b_ref, o_ref, acc_ref):
    h = pl.program_id(2)

    @pl.when(h == 0)
    def _():
        acc_ref[...] = jnp.zeros_like(acc_ref)

    acc_ref[...] += jax.lax.dot_general(
        x_ref[0], w_ref[0],
        dimension_numbers=(((1,), (0,)), ((), ())),
        preferred_element_type=jnp.float32)

    @pl.when(h == pl.num_programs(2) - 1)
    def _():
        o_ref[...] = (acc_ref[...]
                      + b_ref[...].astype(jnp.float32)).astype(o_ref.dtype)


def merge_dense(x_hm, w, b, *, block_m=256, block_n=256):
    """x_hm: (H, M, depth) head-major activations; w: (Dout, H*depth) torch
    layout; b: (Dout,).  Returns merged(x_hm) @ w.T + b of shape (M, Dout)."""
    num_heads, M, depth = x_hm.shape
    Dout = w.shape[0]
    # One-time weight re-arrangement: (Dout, H*depth) -> (H, depth, Dout) so
    # each per-head slice is a plain (K, N) operand for the MXU.
    w_hm = w.reshape(Dout, num_heads, depth).transpose(1, 2, 0)
    b2d = b.reshape(1, Dout)

    tm = min(block_m, M)
    tn = min(block_n, Dout)
    grid = (pl.cdiv(M, tm), pl.cdiv(Dout, tn), num_heads)
    return pl.pallas_call(
        _merge_dense_kernel,
        out_shape=jax.ShapeDtypeStruct((M, Dout), x_hm.dtype),
        grid=grid,
        in_specs=[
            pl.BlockSpec((1, tm, depth), lambda i, j, h: (h, i, 0)),
            pl.BlockSpec((1, depth, tn), lambda i, j, h: (h, 0, j)),
            pl.BlockSpec((1, tn), lambda i, j, h: (0, j)),
        ],
        out_specs=pl.BlockSpec((tm, tn), lambda i, j, h: (i, j)),
        scratch_shapes=[pltpu.VMEM((tm, tn), jnp.float32)],
        compiler_params=pltpu.CompilerParams(
            dimension_semantics=("parallel", "parallel", "arbitrary")),
    )(x_hm, w_hm, b2d)


# ----------------------------------------------------------------------------
# Full module forward.
# ----------------------------------------------------------------------------
def multi_head_attention(v, k, q, params, num_heads):
    B, Sq, D = q.shape
    Sk = k.shape[1]

    q_hm = head_projection(q.reshape(-1, D), params["wq_w"], params["wq_b"], num_heads)
    k_hm = head_projection(k.reshape(-1, D), params["wk_w"], params["wk_b"], num_heads)
    v_hm = head_projection(v.reshape(-1, D), params["wv_w"], params["wv_b"], num_heads)

    attn_hm, attn_weights = attention(q_hm, k_hm, v_hm,
                                      batch=B, q_len=Sq, kv_len=Sk)

    # The PyTorch forward applies `self.dense` twice.  Algebraically:
    #   (x @ W^T + b) @ W^T + b == x @ (W @ W)^T + (b @ W^T + b)
    # so it is folded into a single linear (half the FLOPs / HBM traffic).
    w_d, b_d = params["dense_w"], params["dense_b"]
    hi = jax.lax.Precision.HIGHEST
    w_eff = jnp.matmul(w_d, w_d, precision=hi)
    b_eff = jnp.matmul(b_d, w_d.T, precision=hi) + b_d

    out = merge_dense(attn_hm, w_eff, b_eff).reshape(B, Sq, D)

    # dropout: identity (inference semantics)
    return out, attn_weights


# ----------------------------------------------------------------------------
# Deterministic parameter init (PyTorch nn.Linear-style uniform).
# ----------------------------------------------------------------------------
def init_params(key, d_model):
    bound = 1.0 / math.sqrt(d_model)
    names = ["wq", "wk", "wv", "dense"]
    params = {}
    for i, n in enumerate(names):
        kw, kb = jax.random.split(jax.random.fold_in(key, i))
        params[n + "_w"] = jax.random.uniform(
            kw, (d_model, d_model), jnp.float32, -bound, bound)
        params[n + "_b"] = jax.random.uniform(
            kb, (d_model,), jnp.float32, -bound, bound)
    return params


def _reference(v, k, q, params, num_heads):
    """Pure-JAX reference of the same forward (dense applied twice)."""
    B, Sq, D = q.shape
    Sk = k.shape[1]
    depth = D // num_heads
    hi = jax.lax.Precision.HIGHEST
    lin = lambda x, w, b: jnp.matmul(x, w.T, precision=hi) + b
    qp = lin(q, params["wq_w"], params["wq_b"])
    kp = lin(k, params["wk_w"], params["wk_b"])
    vp = lin(v, params["wv_w"], params["wv_b"])
    qh = qp.reshape(B, Sq, num_heads, depth).transpose(0, 2, 1, 3)
    kh = kp.reshape(B, Sk, num_heads, depth).transpose(0, 2, 1, 3)
    vh = vp.reshape(B, Sk, num_heads, depth).transpose(0, 2, 1, 3)
    scores = jnp.einsum("bhqd,bhkd->bhqk", qh, kh, precision=hi) / math.sqrt(depth)
    attn = jax.nn.softmax(scores, axis=-1)
    out = jnp.einsum("bhqk,bhkd->bhqd", attn, vh, precision=hi)
    out = out.transpose(0, 2, 1, 3).reshape(B, Sq, D)
    out = lin(out, params["dense_w"], params["dense_b"])
    out = lin(out, params["dense_w"], params["dense_b"])
    return out, attn


if __name__ == "__main__":
    key = jax.random.PRNGKey(0)
    B, S, d_model, num_heads = 2, 8, 32, 4

    kq, kk, kv, kp = jax.random.split(key, 4)
    q = jax.random.normal(kq, (B, S, d_model), jnp.float32)
    k = jax.random.normal(kk, (B, S, d_model), jnp.float32)
    v = jax.random.normal(kv, (B, S, d_model), jnp.float32)
    params = init_params(kp, d_model)

    mha = jax.jit(functools.partial(multi_head_attention, num_heads=num_heads))
    out, attn_w = mha(v, k, q, params)
    out = jax.block_until_ready(out)
    attn_w = jax.block_until_ready(attn_w)

    ref_out, ref_attn = _reference(v, k, q, params, num_heads)
    # Tolerances cover MXU f32 accumulation-order differences and the folded
    # double-dense rounding order vs. the two-pass reference.
    assert jnp.allclose(out, ref_out, atol=5e-3, rtol=5e-3), (
        float(jnp.max(jnp.abs(out - ref_out))))
    assert jnp.allclose(attn_w, ref_attn, atol=1e-3, rtol=1e-3), (
        float(jnp.max(jnp.abs(attn_w - ref_attn))))

    print("KERNEL_OK")
</pallas_src>

<mosaic_0001>
module attributes {stable_mosaic.version = 11 : i64} {
  func.func @_head_proj_kernel(%arg0: i32, %arg1: i32, %arg2: memref<16x32xf32, #tpu.memory_space<vmem>>, %arg3: memref<1x32x8xf32, #tpu.memory_space<vmem>>, %arg4: memref<1x1x8xf32, #tpu.memory_space<vmem>>, %arg5: memref<1x16x8xf32, #tpu.memory_space<vmem>>) attributes {dimension_semantics = [#tpu.dimension_semantics<parallel>, #tpu.dimension_semantics<parallel>], iteration_bounds = array<i64: 1, 4>, scalar_prefetch = 0 : i64, scratch_operands = 0 : i64, tpu.core_type = #tpu.core_type<tc>, window_params = [{transform_indices = @transform_0, window_bounds = array<i64: 16, 32>}, {transform_indices = @transform_1, window_bounds = array<i64: 1, 32, 8>}, {transform_indices = @transform_2, window_bounds = array<i64: 1, 1, 8>}, {transform_indices = @transform_3, window_bounds = array<i64: 1, 16, 8>}]} {
    %c0 = arith.constant 0 : index
    %c0_0 = arith.constant 0 : index
    %0 = vector.load %arg2[%c0, %c0_0] : memref<16x32xf32, #tpu.memory_space<vmem>>, vector<16x32xf32>
    %c0_1 = arith.constant 0 : index
    %c0_2 = arith.constant 0 : index
    %c0_3 = arith.constant 0 : index
    %1 = vector.load %arg3[%c0_1, %c0_2, %c0_3] : memref<1x32x8xf32, #tpu.memory_space<vmem>>, vector<1x32x8xf32>
    %2 = vector.shape_cast %1 : vector<1x32x8xf32> to vector<32x8xf32>
    %cst = arith.constant dense<0.000000e+00> : vector<16x8xf32>
    %3 = tpu.matmul %0, %2, %cst {dimension_numbers = #tpu.dot_dimension_numbers<[1], [0], [0], [1], [0, 0, 1, 1], [], []>} : vector<16x32xf32>, vector<32x8xf32>, vector<16x8xf32> -> vector<16x8xf32>
    %c0_4 = arith.constant 0 : index
    %c0_5 = arith.constant 0 : index
    %c0_6 = arith.constant 0 : index
    %4 = vector.load %arg4[%c0_4, %c0_5, %c0_6] : memref<1x1x8xf32, #tpu.memory_space<vmem>>, vector<1x1x8xf32>
    %5 = vector.shape_cast %4 : vector<1x1x8xf32> to vector<1x8xf32>
    %6 = vector.broadcast %5 : vector<1x8xf32> to vector<16x8xf32>
    %7 = arith.addf %3, %6 : vector<16x8xf32>
    %c0_7 = arith.constant 0 : index
    %c0_8 = arith.constant 0 : index
    %c0_9 = arith.constant 0 : index
    %8 = vector.load %arg5[%c0_7, %c0_8, %c0_9] : memref<1x16x8xf32, #tpu.memory_space<vmem>>, vector<1x16x8xf32>
    %9 = vector.shape_cast %8 : vector<1x16x8xf32> to vector<16x8xf32>
    %10 = vector.shape_cast %7 : vector<16x8xf32> to vector<1x16x8xf32>
    tpu.vector_store %arg5[%c0_7, %c0_8, %c0_9], %10 {strides = array<i32>} : memref<1x16x8xf32, #tpu.memory_space<vmem>>, vector<1x16x8xf32>,
    return
  }
  func.func @transform_0(%arg0: i32, %arg1: i32) -> (i32, i32) {
    %c0_i32 = arith.constant 0 : i32
    %c0_i32_0 = arith.constant 0 : i32
    return %arg0, %c0_i32 : i32, i32
  }
  func.func @transform_1(%arg0: i32, %arg1: i32) -> (i32, i32, i32) {
    %c0_i32 = arith.constant 0 : i32
    %c0_i32_0 = arith.constant 0 : i32
    %c0_i32_1 = arith.constant 0 : i32
    return %arg1, %c0_i32, %c0_i32_0 : i32, i32, i32
  }
  func.func @transform_2(%arg0: i32, %arg1: i32) -> (i32, i32, i32) {
    %c0_i32 = arith.constant 0 : i32
    %c0_i32_0 = arith.constant 0 : i32
    %c0_i32_1 = arith.constant 0 : i32
    return %arg1, %c0_i32, %c0_i32_0 : i32, i32, i32
  }
  func.func @transform_3(%arg0: i32, %arg1: i32) -> (i32, i32, i32) {
    %c0_i32 = arith.constant 0 : i32
    %c0_i32_0 = arith.constant 0 : i32
    return %arg1, %arg0, %c0_i32 : i32, i32, i32
  }
}

module attributes {stable_mosaic.version = 11 : i64} {
  func.func @_attention_kernel(%arg0: i32, %arg1: i32, %arg2: memref<1x8x8xf32, #tpu.memory_space<vmem>>, %arg3: memref<1x8x8xf32, #tpu.memory_space<vmem>>, %arg4: memref<1x8x8xf32, #tpu.memory_space<vmem>>, %arg5: memref<1x8x8xf32, #tpu.memory_space<vmem>>, %arg6: memref<1x1x8x8xf32, #tpu.memory_space<vmem>>) attributes {dimension_semantics = [#tpu.dimension_semantics<parallel>, #tpu.dimension_semantics<parallel>], iteration_bounds = array<i64: 2, 4>, scalar_prefetch = 0 : i64, scratch_operands = 0 : i64, tpu.core_type = #tpu.core_type<tc>, window_params = [{transform_indices = @transform_0, window_bounds = array<i64: 1, 8, 8>}, {transform_indices = @transform_1, window_bounds = array<i64: 1, 8, 8>}, {transform_indices = @transform_2, window_bounds = array<i64: 1, 8, 8>}, {transform_indices = @transform_3, window_bounds = array<i64: 1, 8, 8>}, {transform_indices = @transform_4, window_bounds = array<i64: 1, 1, 8, 8>}]} {
    %c0 = arith.constant 0 : index
    %c0_0 = arith.constant 0 : index
    %c0_1 = arith.constant 0 : index
    %0 = vector.load %arg2[%c0, %c0_0, %c0_1] : memref<1x8x8xf32, #tpu.memory_space<vmem>>, vector<1x8x8xf32>
    %1 = vector.shape_cast %0 : vector<1x8x8xf32> to vector<8x8xf32>
    %cst = arith.constant 0.353553385 : f32
    %2 = vector.broadcast %cst : f32 to vector<8x8xf32>
    %3 = arith.mulf %1, %2 : vector<8x8xf32>
    %c0_2 = arith.constant 0 : index
    %c0_3 = arith.constant 0 : index
    %c0_4 = arith.constant 0 : index
    %4 = vector.load %arg3[%c0_2, %c0_3, %c0_4] : memref<1x8x8xf32, #tpu.memory_space<vmem>>, vector<1x8x8xf32>
    %5 = vector.shape_cast %4 : vector<1x8x8xf32> to vector<8x8xf32>
    %c0_5 = arith.constant 0 : index
    %c0_6 = arith.constant 0 : index
    %c0_7 = arith.constant 0 : index
    %6 = vector.load %arg4[%c0_5, %c0_6, %c0_7] : memref<1x8x8xf32, #tpu.memory_space<vmem>>, vector<1x8x8xf32>
    %7 = vector.shape_cast %6 : vector<1x8x8xf32> to vector<8x8xf32>
    %cst_8 = arith.constant dense<0.000000e+00> : vector<8x8xf32>
    %8 = tpu.matmul %3, %5, %cst_8 {dimension_numbers = #tpu.dot_dimension_numbers<[1], [1], [0], [0], [0, 0, 1, 0], [], []>} : vector<8x8xf32>, vector<8x8xf32>, vector<8x8xf32> -> vector<8x8xf32>
    %cst_9 = arith.constant dense<0xFF800000> : vector<8xf32>
    %9 = vector.multi_reduction <maximumf>, %8, %cst_9 [1] : vector<8x8xf32> to vector<8xf32>
    %10 = vector.shape_cast %9 : vector<8xf32> to vector<8x1xf32>
    %11 = vector.broadcast %10 : vector<8x1xf32> to vector<8x8xf32>
    %12 = arith.subf %8, %11 : vector<8x8xf32>
    %13 = math.exp %12 : vector<8x8xf32>
    %cst_10 = arith.constant dense<0.000000e+00> : vector<8xf32>
    %14 = vector.multi_reduction <add>, %13, %cst_10 [1] : vector<8x8xf32> to vector<8xf32>
    %15 = vector.shape_cast %14 : vector<8xf32> to vector<8x1xf32>
    %16 = vector.broadcast %15 : vector<8x1xf32> to vector<8x8xf32>
    %17 = arith.divf %13, %16 : vector<8x8xf32>
    %c0_11 = arith.constant 0 : index
    %c0_12 = arith.constant 0 : index
    %c0_13 = arith.constant 0 : index
    %c0_14 = arith.constant 0 : index
    %18 = vector.load %arg6[%c0_11, %c0_12, %c0_13, %c0_14] : memref<1x1x8x8xf32, #tpu.memory_space<vmem>>, vector<1x1x8x8xf32>
    %19 = vector.shape_cast %18 : vector<1x1x8x8xf32> to vector<8x8xf32>
    %20 = vector.shape_cast %17 : vector<8x8xf32> to vector<1x1x8x8xf32>
    tpu.vector_store %arg6[%c0_11, %c0_12, %c0_13, %c0_14], %20 {strides = array<i32>} : memref<1x1x8x8xf32, #tpu.memory_space<vmem>>, vector<1x1x8x8xf32>,
    %cst_15 = arith.constant dense<0.000000e+00> : vector<8x8xf32>
    %21 = tpu.matmul %17, %7, %cst_15 {dimension_numbers = #tpu.dot_dimension_numbers<[1], [0], [0], [1], [0, 0, 1, 1], [], []>} : vector<8x8xf32>, vector<8x8xf32>, vector<8x8xf32> -> vector<8x8xf32>
    %c0_16 = arith.constant 0 : index
    %c0_17 = arith.constant 0 : index
    %c0_18 = arith.constant 0 : index
    %22 = vector.load %arg5[%c0_16, %c0_17, %c0_18] : memref<1x8x8xf32, #tpu.memory_space<vmem>>, vector<1x8x8xf32>
    %23 = vector.shape_cast %22 : vector<1x8x8xf32> to vector<8x8xf32>
    %24 = vector.shape_cast %21 : vector<8x8xf32> to vector<1x8x8xf32>
    tpu.vector_store %arg5[%c0_16, %c0_17, %c0_18], %24 {strides = array<i32>} : memref<1x8x8xf32, #tpu.memory_space<vmem>>, vector<1x8x8xf32>,
    return
  }
  func.func @transform_0(%arg0: i32, %arg1: i32) -> (i32, i32, i32) {
    %c0_i32 = arith.constant 0 : i32
    %c0_i32_0 = arith.constant 0 : i32
    return %arg1, %arg0, %c0_i32 : i32, i32, i32
  }
  func.func @transform_1(%arg0: i32, %arg1: i32) -> (i32, i32, i32) {
    %c0_i32 = arith.constant 0 : i32
    %c0_i32_0 = arith.constant 0 : i32
    return %arg1, %arg0, %c0_i32 : i32, i32, i32
  }
  func.func @transform_2(%arg0: i32, %arg1: i32) -> (i32, i32, i32) {
    %c0_i32 = arith.constant 0 : i32
    %c0_i32_0 = arith.constant 0 : i32
    return %arg1, %arg0, %c0_i32 : i32, i32, i32
  }
  func.func @transform_3(%arg0: i32, %arg1: i32) -> (i32, i32, i32) {
    %c0_i32 = arith.constant 0 : i32
    %c0_i32_0 = arith.constant 0 : i32
    return %arg1, %arg0, %c0_i32 : i32, i32, i32
  }
  func.func @transform_4(%arg0: i32, %arg1: i32) -> (i32, i32, i32, i32) {
    %c0_i32 = arith.constant 0 : i32
    %c0_i32_0 = arith.constant 0 : i32
    %c0_i32_1 = arith.constant 0 : i32
    return %arg0, %arg1, %c0_i32, %c0_i32_0 : i32, i32, i32, i32
  }
}

module attributes {stable_mosaic.version = 11 : i64} {
  func.func @_merge_dense_kernel(%arg0: i32, %arg1: i32, %arg2: i32, %arg3: memref<1x16x8xf32, #tpu.memory_space<vmem>>, %arg4: memref<1x8x32xf32, #tpu.memory_space<vmem>>, %arg5: memref<1x32xf32, #tpu.memory_space<vmem>>, %arg6: memref<16x32xf32, #tpu.memory_space<vmem>>, %arg7: memref<16x32xf32, #tpu.memory_space<vmem>>) attributes {dimension_semantics = [#tpu.dimension_semantics<parallel>, #tpu.dimension_semantics<parallel>, #tpu.dimension_semantics<arbitrary>], iteration_bounds = array<i64: 1, 1, 4>, scalar_prefetch = 0 : i64, scratch_operands = 1 : i64, tpu.core_type = #tpu.core_type<tc>, window_params = [{transform_indices = @transform_0, window_bounds = array<i64: 1, 16, 8>}, {transform_indices = @transform_1, window_bounds = array<i64: 1, 8, 32>}, {transform_indices = @transform_2, window_bounds = array<i64: 1, 32>}, {transform_indices = @transform_3, window_bounds = array<i64: 16, 32>}]} {
    %c0_i32 = arith.constant 0 : i32
    %0 = arith.cmpi eq, %arg2, %c0_i32 : i32
    %1 = arith.extui %0 : i1 to i32
    %c0_i32_0 = arith.constant 0 : i32
    %2 = arith.cmpi ne, %1, %c0_i32_0 : i32
    scf.if %2 {
      %cst_11 = arith.constant 0.000000e+00 : f32
      %14 = vector.broadcast %cst_11 : f32 to vector<16x32xf32>
      %c0_12 = arith.constant 0 : index
      %c0_13 = arith.constant 0 : index
      %15 = vector.load %arg7[%c0_12, %c0_13] : memref<16x32xf32, #tpu.memory_space<vmem>>, vector<16x32xf32>
      tpu.vector_store %arg7[%c0_12, %c0_13], %14 {strides = array<i32>} : memref<16x32xf32, #tpu.memory_space<vmem>>, vector<16x32xf32>,
    } else {
    }
    %c0 = arith.constant 0 : index
    %c0_1 = arith.constant 0 : index
    %3 = vector.load %arg7[%c0, %c0_1] : memref<16x32xf32, #tpu.memory_space<vmem>>, vector<16x32xf32>
    %c0_2 = arith.constant 0 : index
    %c0_3 = arith.constant 0 : index
    %c0_4 = arith.constant 0 : index
    %4 = vector.load %arg3[%c0_2, %c0_3, %c0_4] : memref<1x16x8xf32, #tpu.memory_space<vmem>>, vector<1x16x8xf32>
    %5 = vector.shape_cast %4 : vector<1x16x8xf32> to vector<16x8xf32>
    %c0_5 = arith.constant 0 : index
    %c0_6 = arith.constant 0 : index
    %c0_7 = arith.constant 0 : index
    %6 = vector.load %arg4[%c0_5, %c0_6, %c0_7] : memref<1x8x32xf32, #tpu.memory_space<vmem>>, vector<1x8x32xf32>
    %7 = vector.shape_cast %6 : vector<1x8x32xf32> to vector<8x32xf32>
    %cst = arith.constant dense<0.000000e+00> : vector<16x32xf32>
    %8 = tpu.matmul %5, %7, %cst {dimension_numbers = #tpu.dot_dimension_numbers<[1], [0], [0], [1], [0, 0, 1, 1], [], []>} : vector<16x8xf32>, vector<8x32xf32>, vector<16x32xf32> -> vector<16x32xf32>
    %9 = arith.addf %3, %8 : vector<16x32xf32>
    %c0_8 = arith.constant 0 : index
    %c0_9 = arith.constant 0 : index
    %10 = vector.load %arg7[%c0_8, %c0_9] : memref<16x32xf32, #tpu.memory_space<vmem>>, vector<16x32xf32>
    tpu.vector_store %arg7[%c0_8, %c0_9], %9 {strides = array<i32>} : memref<16x32xf32, #tpu.memory_space<vmem>>, vector<16x32xf32>,
    %c3_i32 = arith.constant 3 : i32
    %11 = arith.cmpi eq, %arg2, %c3_i32 : i32
    %12 = arith.extui %11 : i1 to i32
    %c0_i32_10 = arith.constant 0 : i32
    %13 = arith.cmpi ne, %12, %c0_i32_10 : i32
    scf.if %13 {
      %c0_11 = arith.constant 0 : index
      %c0_12 = arith.constant 0 : index
      %14 = vector.load %arg7[%c0_11, %c0_12] : memref<16x32xf32, #tpu.memory_space<vmem>>, vector<16x32xf32>
      %c0_13 = arith.constant 0 : index
      %c0_14 = arith.constant 0 : index
      %15 = vector.load %arg5[%c0_13, %c0_14] : memref<1x32xf32, #tpu.memory_space<vmem>>, vector<1x32xf32>
      %16 = vector.broadcast %15 : vector<1x32xf32> to vector<16x32xf32>
      %17 = arith.addf %14, %16 : vector<16x32xf32>
      %c0_15 = arith.constant 0 : index
      %c0_16 = arith.constant 0 : index
      %18 = vector.load %arg6[%c0_15, %c0_16] : memref<16x32xf32, #tpu.memory_space<vmem>>, vector<16x32xf32>
      tpu.vector_store %arg6[%c0_15, %c0_16], %17 {strides = array<i32>} : memref<16x32xf32, #tpu.memory_space<vmem>>, vector<16x32xf32>,
    } else {
    }
    return
  }
  func.func @transform_0(%arg0: i32, %arg1: i32, %arg2: i32) -> (i32, i32, i32) {
    %c0_i32 = arith.constant 0 : i32
    %c0_i32_0 = arith.constant 0 : i32
    return %arg2, %arg0, %c0_i32 : i32, i32, i32
  }
  func.func @transform_1(%arg0: i32, %arg1: i32, %arg2: i32) -> (i32, i32, i32) {
    %c0_i32 = arith.constant 0 : i32
    %c0_i32_0 = arith.constant 0 : i32
    return %arg2, %c0_i32, %arg1 : i32, i32, i32
  }
  func.func @transform_2(%arg0: i32, %arg1: i32, %arg2: i32) -> (i32, i32) {
    %c0_i32 = arith.constant 0 : i32
    %c0_i32_0 = arith.constant 0 : i32
    return %c0_i32, %arg1 : i32, i32
  }
  func.func @transform_3(%arg0: i32, %arg1: i32, %arg2: i32) -> (i32, i32) {
    %c0_i32 = arith.constant 0 : i32
    return %arg0, %arg1 : i32, i32
  }
}

</mosaic_0001>

<llo_original>
// kernel: multi_head_attention.5
$region0: #{multi_head_attention.5}
  #allocation0 [shape = 'u32[]', space=smem, size = 0x4, offset = 0x4, fixed_abs, tag = 'smem constant byte address 0x4 - core index']
  #allocation1 [shape = 'u32[144,128]{1,0:T(1,128)}', space=vmem, size = 0x12000, scoped, tag = 'internal scratch']
  %s0 = inlined_call_operand.vmem [shape: f32[16,32], index: 0, kind: input, shape index: {}]
  %s1 = inlined_call_operand.vmem [shape: f32[4,32,8], index: 1, kind: input, shape index: {}]
  %s2 = inlined_call_operand.vmem [shape: f32[4,1,8], index: 2, kind: input, shape index: {}]
  %s3 = inlined_call_operand.vmem [shape: f32[4,16,8], index: 3, kind: output, shape index: {}]
  %s4 = sld [smem:[#allocation0]]
  $region45: #{multi_head_attention.5} parent=0
    _
  %s6 = ssub.s32 1, %s4
  %s7 = scalar_select 0, %s6, %s4
  loop: start=0, step=1, limit=6
  $region2: #{multi_head_attention.5} parent=0 // loop_pre_header
    _
  $region3: #{multi_head_attention.5} parent=0 // loop_header
    %s9 = sphi 0, %s13
    %p10 = scmp.ge.s32.totalorder %s9, 6
    %s16 = sphi 0, %s28
    %s17 = sphi 0, %s24
    %s18 = sphi 0, %s16
    %s19 = sphi 0, %s17
    %s20 = sphi 0, %s18
    %s21 = sphi 0, %s19
    %s31 = sphi 0, %s33
    %s34 = sphi 0, %s31
    %s35 = sphi 0, %s34
    %s51 = sphi 0, %s35
    %s57 = sphi 0, %s59
    %s60 = sphi 0, %s57
    %s61 = sphi 0, %s60
    %s77 = sphi 0, %s61
    %s83 = sphi 0, %s85
    %s86 = sphi 0, %s83
    %s87 = sphi 0, %s86
    %s103 = sphi 0, %s87
    %s111 = sphi 0, %s113
    %s114 = sphi 0, %s111
    %s115 = sphi 0, %s114
    %s131 = sphi 0, %s115
  $region4: #{multi_head_attention.5} parent=0 // loop_header_branch
    %12 = sbr.rel (%p10) target = $region8
  $region5: #{multi_head_attention.5} parent=0 // loop_body
    %s14 = ssub.s32 %s9, 1
    %s15 = ssub.s32 %s9, 2
    %s22 = sadd.s32 1, %s17
    %p23 = scmp.ge.s32.totalorder %s22, 4
    %s24 = scalar_select %p23, 0, %s22
    %s25 = sadd.s32 1, %s16
    %s26 = scalar_select %p23, %s25, %s16
    %p27 = scmp.ge.s32.totalorder %s26, 1
    %s28 = scalar_select %p27, 0, %s26
    %s29 = ssub.s32 %s16, %s28
    %p30 = scmp.eq.s32.totalorder %s29, 0
    %s32 = sadd.s32 %s31, 1
    %s33 = scalar_select %p30, %s31, %s32
    %p36 = pneg %p30
    %p37 = scmp.eq.s32.totalorder %s9, 3
    %p38 = por %p36, %p37
    %p39 = scmp.ne.s32.totalorder %s31, %s34
    %p40 = scmp.eq.s32.totalorder %s9, 0
    %p41 = por %p39, %p40
    %p42 = scmp.ne.s32.totalorder %s31, %s34
    %p43 = scmp.eq.s32.totalorder %s14, 3
    %p44 = por %p42, %p43
    %p45 = scmp.ne.s32.totalorder %s34, %s35
    %p46 = scmp.eq.s32.totalorder %s14, 0
    %p47 = por %p45, %p46
    %p48 = scmp.ne.s32.totalorder %s34, %s35
    %p49 = scmp.eq.s32.totalorder %s15, 3
    %p50 = por %p48, %p49
    %p52 = scmp.ne.s32.totalorder %s35, %s51
    %p53 = scmp.eq.s32.totalorder %s15, 0
    %p54 = por %p52, %p53
    %s55 = ssub.s32 %s17, %s24
    %p56 = scmp.eq.s32.totalorder %s55, 0
    %s58 = sadd.s32 %s57, 1
    %s59 = scalar_select %p56, %s57, %s58
    %p62 = pneg %p56
    %p63 = scmp.eq.s32.totalorder %s9, 3
    %p64 = por %p62, %p63
    %p65 = scmp.ne.s32.totalorder %s57, %s60
    %p66 = scmp.eq.s32.totalorder %s9, 0
    %p67 = por %p65, %p66
    %p68 = scmp.ne.s32.totalorder %s57, %s60
    %p69 = scmp.eq.s32.totalorder %s14, 3
    %p70 = por %p68, %p69
    %p71 = scmp.ne.s32.totalorder %s60, %s61
    %p72 = scmp.eq.s32.totalorder %s14, 0
    %p73 = por %p71, %p72
    %p74 = scmp.ne.s32.totalorder %s60, %s61
    %p75 = scmp.eq.s32.totalorder %s15, 3
    %p76 = por %p74, %p75
    %p78 = scmp.ne.s32.totalorder %s61, %s77
    %p79 = scmp.eq.s32.totalorder %s15, 0
    %p80 = por %p78, %p79
    %s81 = ssub.s32 %s17, %s24
    %p82 = scmp.eq.s32.totalorder %s81, 0
    %s84 = sadd.s32 %s83, 1
    %s85 = scalar_select %p82, %s83, %s84
    %p88 = pneg %p82
    %p89 = scmp.eq.s32.totalorder %s9, 3
    %p90 = por %p88, %p89
    %p91 = scmp.ne.s32.totalorder %s83, %s86
    %p92 = scmp.eq.s32.totalorder %s9, 0
    %p93 = por %p91, %p92
    %p94 = scmp.ne.s32.totalorder %s83, %s86
    %p95 = scmp.eq.s32.totalorder %s14, 3
    %p96 = por %p94, %p95
    %p97 = scmp.ne.s32.totalorder %s86, %s87
    %p98 = scmp.eq.s32.totalorder %s14, 0
    %p99 = por %p97, %p98
    %p100 = scmp.ne.s32.totalorder %s86, %s87
    %p101 = scmp.eq.s32.totalorder %s15, 3
    %p102 = por %p100, %p101
    %p104 = scmp.ne.s32.totalorder %s87, %s103
    %p105 = scmp.eq.s32.totalorder %s15, 0
    %p106 = por %p104, %p105
    %s107 = ssub.s32 %s17, %s24
    %s108 = ssub.s32 %s16, %s28
    %s109 = sor.u32 %s107, %s108
    %p110 = scmp.eq.s32.totalorder %s109, 0
    %s112 = sadd.s32 %s111, 1
    %s113 = scalar_select %p110, %s111, %s112
    %p116 = pneg %p110
    %p117 = scmp.eq.s32.totalorder %s9, 3
    %p118 = por %p116, %p117
    %p119 = scmp.ne.s32.totalorder %s111, %s114
    %p120 = scmp.eq.s32.totalorder %s9, 0
    %p121 = por %p119, %p120
    %p122 = scmp.ne.s32.totalorder %s111, %s114
    %p123 = scmp.eq.s32.totalorder %s14, 3
    %p124 = por %p122, %p123
    %p125 = scmp.ne.s32.totalorder %s114, %s115
    %p126 = scmp.eq.s32.totalorder %s14, 0
    %p127 = por %p125, %p126
    %p128 = scmp.ne.s32.totalorder %s114, %s115
    %p129 = scmp.eq.s32.totalorder %s15, 3
    %p130 = por %p128, %p129
    %p132 = scmp.ne.s32.totalorder %s115, %s131
    %p133 = scmp.eq.s32.totalorder %s15, 0
    %p134 = por %p132, %p133
    %p135 = scmp.le.s32.totalorder 1, %s9
    %p136 = scmp.lt.s32.totalorder %s9, 5
    %p137 = pnand %p135, %p136
    %p138 = pneg %p137
    // Predicated region
    $region9: #{multi_head_attention.5} parent=5 // pred_check
      _
    $region10: #{multi_head_attention.5} parent=5 // pred_check_branch
      %140 = sbr.rel (%p137) target = $region12
    $region11: #{multi_head_attention.5} parent=5 // pred_region
      %s141 = ssub.s32 %s9, 1
      // Predicated region
      $region13: #{multi_head_attention.5} parent=11 // pred_check
        %p142 = pneg %p47
      $region14: #{multi_head_attention.5} parent=11 // pred_check_branch
        %144 = sbr.rel (%p142) target = $region16
      $region15: #{multi_head_attention.5} parent=11 // pred_region
        %s145 = smul.u32 2, %s18
        %p146 = scmp.lt.s32.totalorder %s145, 1
        %s147 = scalar_select %p146, %s145, 1
        %s148 = smul.addr %s147, 8
        %s149 = scalar_lea.vmem %s0, %s148
        %s150 = smul.u32 2, %s18
      $region16: #{multi_head_attention.5} parent=11 // pred_fallthru
        _
    $region12: #{multi_head_attention.5} parent=5 // pred_fallthru
      _
    %p151 = scmp.lt.s32.totalorder %s9, 4
    // Predicated region
    $region17: #{multi_head_attention.5} parent=5 // pred_check
      %p152 = pneg %p151
    $region18: #{multi_head_attention.5} parent=5 // pred_check_branch
      %154 = sbr.rel (%p152) target = $region20
    $region19: #{multi_head_attention.5} parent=5 // pred_region
      // Predicated region
      $region21: #{multi_head_attention.5} parent=19 // pred_check
        %p155 = pneg %p67
      $region22: #{multi_head_attention.5} parent=19 // pred_check_branch
        %157 = sbr.rel (%p155) target = $region24
      $region23: #{multi_head_attention.5} parent=19 // pred_region
        %p158 = scmp.lt.s32.totalorder %s17, 3
        %s159 = scalar_select %p158, %s17, 3
        %s160 = smul.addr %s159, 4
        %s161 = smul.addr %s160, 8
        %s162 = scalar_lea.vmem %s1, %s161
      $region24: #{multi_head_attention.5} parent=19 // pred_fallthru
        _
      // Predicated region
      $region25: #{multi_head_attention.5} parent=19 // pred_check
        %p163 = pneg %p93
      $region26: #{multi_head_attention.5} parent=19 // pred_check_branch
        %165 = sbr.rel (%p163) target = $region28
      $region27: #{multi_head_attention.5} parent=19 // pred_region
        %p166 = scmp.lt.s32.totalorder %s17, 3
        %s167 = scalar_select %p166, %s17, 3
        %s168 = scalar_lea.vmem %s2, %s167
      $region28: #{multi_head_attention.5} parent=19 // pred_fallthru
        _
    $region20: #{multi_head_attention.5} parent=5 // pred_fallthru
      _
    %p169 = scmp.le.s32.totalorder 1, %s9
    %p170 = scmp.lt.s32.totalorder %s9, 5
    %p171 = pnand %p169, %p170
    %p172 = pneg %p171
    // Predicated region
    $region29: #{multi_head_attention.5} parent=5 // pred_check
      _
    $region30: #{multi_head_attention.5} parent=5 // pred_check_branch
      %174 = sbr.rel (%p171) target = $region32
    $region31: #{multi_head_attention.5} parent=5 // pred_region
      %s175 = ssub.s32 %s9, 1
      %s176 = smul.u32 2, %s18
      %p177 = scmp.lt.s32.totalorder %s176, 1
      %s178 = scalar_select %p177, %s176, 1
      %s179 = smul.addr %s178, 8
      %s180 = scalar_lea.vmem %s0, %s179
      %p181 = pneg %p47
      %p182 = pneg %p44
      %p183 = scmp.lt.s32.totalorder %s19, 3
      %s184 = scalar_select %p183, %s19, 3
      %s185 = smul.addr %s184, 4
      %s186 = smul.addr %s185, 8
      %s187 = scalar_lea.vmem %s1, %s186
      %p188 = pneg %p73
      %p189 = pneg %p70
      %p190 = scmp.lt.s32.totalorder %s19, 3
      %s191 = scalar_select %p190, %s19, 3
      %s192 = scalar_lea.vmem %s2, %s191
      %p193 = pneg %p99
      %p194 = pneg %p96
      %p195 = pneg %p127
      %p196 = pneg %p124
      %s197 = smul.u32 2, %s18
      %p198 = scmp.lt.s32.totalorder %s19, 3
      %s199 = scalar_select %p198, %s19, 3
      %p200 = scmp.lt.s32.totalorder %s197, 1
      %s201 = scalar_select %p200, %s197, 1
      %s202 = smul.addr %s199, 2
      %s203 = sadd.s32 %s201, %s202
      %s204 = smul.addr %s203, 8
      %s205 = scalar_lea.vmem %s3, %s204
      %s206 = smul.u32 2, %s18
      %p207 = scmp.lt.s32.totalorder %s206, 1
      %s208 = scalar_select %p207, %s206, 1
      %s209 = smul.addr %s208, 8
      %s210 = scalar_lea.vmem %s0, %s209
      %s211 = smul.u32 2, %s18
      %p212 = scmp.lt.s32.totalorder %s19, 3
      %s213 = scalar_select %p212, %s19, 3
      %s214 = smul.addr %s213, 4
      %s215 = smul.addr %s214, 8
      %s216 = scalar_lea.vmem %s1, %s215
      %p217 = scmp.lt.s32.totalorder %s19, 3
      %s218 = scalar_select %p217, %s19, 3
      %s219 = scalar_lea.vmem %s2, %s218
      %s220 = smul.u32 2, %s18
      %p221 = scmp.lt.s32.totalorder %s19, 3
      %s222 = scalar_select %p221, %s19, 3
      %p223 = scmp.lt.s32.totalorder %s220, 1
      %s224 = scalar_select %p223, %s220, 1
      %s225 = smul.addr %s222, 2
      %s226 = sadd.s32 %s224, %s225
      %s227 = smul.addr %s226, 8
      %s228 = scalar_lea.vmem %s3, %s227
      %s229 = smul.u32 2, %s18
      %v230 = vld [vmem:[%s210] sm:$0xff]
      %v231 = vld [vmem:[%s210 + $0x8] sm:$0xff]
      %v232 = vld [vmem:[%s216] sm:$0xff]
      %v233 = vld [vmem:[%s216 + $0x8] sm:$0xff]
      %v234 = vld [vmem:[%s216 + $0x10] sm:$0xff]
      %v235 = vld [vmem:[%s216 + $0x18] sm:$0xff]
      %v236 = vld [vmem:[%s219] sm:$0x1]
      %v238 = vlaneseq
      %v239 = vshrl.u32 %v238, 7
      %v240 = vsub.s32 0, %v239
      %v241 = vrot.slane %v236, %v240
      %vm243 = vcmask 261120
      %v245 = vsel %vm243, %v230, 0
      %v248 = vsel %vm243, %v231, 0
      %250 = vmatprep.subr.mxu0 0.0
      %251 = vmatpush1.msra.mxu0 0.0
      %252 = vmatprep.subr.mxu0 0.0
      %253 = vmatpush1.msra.mxu0 0.0
      %254 = vmatprep.subr.mxu0 0.0
      %255 = vmatpush1.msra.mxu0 0.0
      %256 = vmatprep.subr.mxu0 0.0
      %257 = vmatpush1.msra.mxu0 0.0
      %258 = vmatprep.subr.mxu0 0.0
      %259 = vmatpush1.msra.mxu0 0.0
      %260 = vmatprep.subr.mxu0 0.0
      %261 = vmatpush1.msra.mxu0 0.0
      %262 = vmatprep.subr.mxu0 0.0
      %263 = vmatpush1.msra.mxu0 0.0
      %264 = vmatprep.subr.mxu0 0.0
      %265 = vmatpush1.msra.mxu0 0.0
      %266 = vmatprep.subr.mxu0 0.0
      %267 = vmatpush1.msra.mxu0 0.0
      %268 = vmatprep.subr.mxu0 0.0
      %269 = vmatpush1.msra.mxu0 0.0
      %270 = vmatprep.subr.mxu0 0.0
      %271 = vmatpush1.msra.mxu0 0.0
      %272 = vmatprep.subr.mxu0 0.0
      %273 = vmatpush1.msra.mxu0 0.0
      %274 = vmatprep.subr.mxu0 0.0
      %275 = vmatpush1.msra.mxu0 %v235
      %276 = vmatprep.subr.mxu0 0.0
      %277 = vmatpush1.msra.mxu0 %v234
      %278 = vmatprep.subr.mxu0 0.0
      %279 = vmatpush1.msra.mxu0 %v233
      %280 = vmatprep.subr.mxu0 0.0
      %281 = vmatpush1.msra.mxu0 %v232
      %282 = vmatprep.subr.mxu0 0.0
      %283 = vmatpush2.msra.mxu0 0.0
      %284 = vmatprep.subr.mxu0 0.0
      %285 = vmatpush2.msra.mxu0 0.0
      %286 = vmatprep.subr.mxu0 0.0
      %287 = vmatpush2.msra.mxu0 0.0
      %288 = vmatprep.subr.mxu0 0.0
      %289 = vmatpush2.msra.mxu0 0.0
      %290 = vmatprep.subr.mxu0 0.0
      %291 = vmatpush2.msra.mxu0 0.0
      %292 = vmatprep.subr.mxu0 0.0
      %293 = vmatpush2.msra.mxu0 0.0
      %294 = vmatprep.subr.mxu0 0.0
      %295 = vmatpush2.msra.mxu0 0.0
      %296 = vmatprep.subr.mxu0 0.0
      %297 = vmatpush2.msra.mxu0 0.0
      %298 = vmatprep.subr.mxu0 0.0
      %299 = vmatpush2.msra.mxu0 0.0
      %300 = vmatprep.subr.mxu0 0.0
      %301 = vmatpush2.msra.mxu0 0.0
      %302 = vmatprep.subr.mxu0 0.0
      %303 = vmatpush2.msra.mxu0 0.0
      %304 = vmatprep.subr.mxu0 0.0
      %305 = vmatpush2.msra.mxu0 0.0
      %306 = vmatprep.subr.mxu0 0.0
      %307 = vmatpush2.msra.mxu0 0.0
      %308 = vmatprep.subr.mxu0 0.0
      %309 = vmatpush2.msra.mxu0 0.0
      %310 = vmatprep.subr.mxu0 0.0
      %311 = vmatpush2.msra.mxu0 0.0
      %312 = vmatprep.subr.mxu0 0.0
      %313 = vmatpush2.msra.mxu0 0.0
      %314 = vmatprep.mubr.f32.mxu0 0.0
      %315 = vmatmul.mubr.f32.gmra.mxu0 %v245
      %v316 = vpop.f32.mrf.mxu0
      %v317 = vadd.f32 %v241, %v316
      %v318 = vpop.f32.mrf.mxu0
      %319 = vmatprep.mubr.f32.mxu0 0.0
      %320 = vmatmul.mubr.f32.gmra.mxu0 %v248
      %v321 = vpop.f32.mrf.mxu0
      %v322 = vadd.f32 %v241, %v321
      %v323 = vpop.f32.mrf.mxu0
      %324 = vdwg.mxu0
      %vm325 = vcmask 64512
      %326 = vst.msk [vmem:[%s228] sm:$0xff] %vm325, %v317
      %327 = vst.msk [vmem:[%s228 + $0x8] sm:$0xff] %vm325, %v322
      %s328 = smul.u32 2, %s18
      %p329 = scmp.lt.s32.totalorder %s19, 3
      %s330 = scalar_select %p329, %s19, 3
      %p331 = scmp.lt.s32.totalorder %s328, 1
      %s332 = scalar_select %p331, %s328, 1
      %s333 = smul.addr %s330, 2
      %s334 = sadd.s32 %s332, %s333
      %s335 = smul.addr %s334, 8
      %s336 = scalar_lea.vmem %s3, %s335
      // Predicated region
      $region33: #{multi_head_attention.5} parent=31 // pred_check
        %p337 = pneg %p124
      $region34: #{multi_head_attention.5} parent=31 // pred_check_branch
        %339 = sbr.rel (%p337) target = $region36
      $region35: #{multi_head_attention.5} parent=31 // pred_region
        %s340 = smul.u32 2, %s18
      $region36: #{multi_head_attention.5} parent=31 // pred_fallthru
        _
    $region32: #{multi_head_attention.5} parent=5 // pred_fallthru
      _
    %p341 = scmp.le.s32.totalorder 2, %s9
    // Predicated region
    $region37: #{multi_head_attention.5} parent=5 // pred_check
      %p342 = pneg %p341
    $region38: #{multi_head_attention.5} parent=5 // pred_check_branch
      %344 = sbr.rel (%p342) target = $region40
    $region39: #{multi_head_attention.5} parent=5 // pred_region
      %s345 = ssub.s32 %s9, 2
      // Predicated region
      $region41: #{multi_head_attention.5} parent=39 // pred_check
        %p346 = pneg %p130
      $region42: #{multi_head_attention.5} parent=39 // pred_check_branch
        %348 = sbr.rel (%p346) target = $region44
      $region43: #{multi_head_attention.5} parent=39 // pred_region
        %s349 = smul.u32 2, %s20
        %p350 = scmp.lt.s32.totalorder %s21, 3
        %s351 = scalar_select %p350, %s21, 3
        %p352 = scmp.lt.s32.totalorder %s349, 1
        %s353 = scalar_select %p352, %s349, 1
        %s354 = smul.addr %s351, 2
        %s355 = sadd.s32 %s353, %s354
        %s356 = smul.addr %s355, 8
        %s357 = scalar_lea.vmem %s3, %s356
      $region44: #{multi_head_attention.5} parent=39 // pred_fallthru
        _
    $region40: #{multi_head_attention.5} parent=5 // pred_fallthru
      _
  $region6: #{multi_head_attention.5} parent=0 // loop_footer
    %s13 = sadd.s32 1, %s9
  $region7: #{multi_head_attention.5} parent=0 // loop_footer_branch
    %8 = sbr.rel target = $region3
  $region8: #{multi_head_attention.5} parent=0 // loop_exit
    _

// kernel: multi_head_attention.8
$region0: #{multi_head_attention.8}
  #allocation0 [shape = 'u32[]', space=smem, size = 0x4, offset = 0x4, fixed_abs, tag = 'smem constant byte address 0x4 - core index']
  #allocation1 [shape = 'u32[144,128]{1,0:T(1,128)}', space=vmem, size = 0x12000, scoped, tag = 'internal scratch']
  %s0 = inlined_call_operand.vmem [shape: f32[4,16,8], index: 0, kind: input, shape index: {}]
  %s1 = inlined_call_operand.vmem [shape: f32[4,16,8], index: 1, kind: input, shape index: {}]
  %s2 = inlined_call_operand.vmem [shape: f32[4,16,8], index: 2, kind: input, shape index: {}]
  %s3 = inlined_call_operand.vmem [shape: f32[4,16,8], index: 3, kind: output, shape index: {0}]
  %s4 = inlined_call_operand.hbm [shape: f32[2,4,8,8], index: 4, kind: output, shape index: {1}]
  %5 = xla_tuple %s3, %s4
  %s6 = sld [smem:[#allocation0]]
  $region53: #{multi_head_attention.8} parent=0
    _
  %s8 = ssub.s32 1, %s6
  %s9 = scalar_select 0, %s8, %s6
  $region1: #{multi_head_attention.8} parent=0
    #allocation2 [shape = 'u8[8192]{0}', space=vmem, size = 0x2000, scoped, tag = 'output window, operand 1']
    #allocation3 [shape = 's32[2]{0}', space=sflag, size = 0x8, scoped, tag = 'scoped memory for multi_head_attention.8']
    %10 = vsyncpa [#allocation3], 0
    %s11 = scalar_lea.sflag [#allocation3], 1
    %12 = vsyncpa %s11, 0
    loop: start=0, step=1, limit=10
    $region2: #{multi_head_attention.8} parent=1 // loop_pre_header
      _
    $region3: #{multi_head_attention.8} parent=1 // loop_header
      %s14 = sphi 0, %s18
      %p15 = scmp.ge.s32.totalorder %s14, 10
      %s21 = sphi 0, %s33
      %s22 = sphi 0, %s29
      %s23 = sphi 0, %s21
      %s24 = sphi 0, %s22
      %s25 = sphi 0, %s23
      %s26 = sphi 0, %s24
      %s38 = sphi 0, %s40
      %s41 = sphi 0, %s38
      %s42 = sphi 0, %s41
      %s58 = sphi 0, %s42
      %s66 = sphi 0, %s68
      %s69 = sphi 0, %s66
      %s70 = sphi 0, %s69
      %s86 = sphi 0, %s70
      %s94 = sphi 0, %s96
      %s97 = sphi 0, %s94
      %s98 = sphi 0, %s97
      %s114 = sphi 0, %s98
      %s122 = sphi 0, %s124
      %s125 = sphi 0, %s122
      %s126 = sphi 0, %s125
      %s142 = sphi 0, %s126
      %s150 = sphi 0, %s152
      %s153 = sphi 0, %s150
      %s154 = sphi 0, %s153
      %s170 = sphi 0, %s154
    $region4: #{multi_head_attention.8} parent=1 // loop_header_branch
      %17 = sbr.rel (%p15) target = $region8
    $region5: #{multi_head_attention.8} parent=1 // loop_body
      %s19 = ssub.s32 %s14, 1
      %s20 = ssub.s32 %s14, 2
      %s27 = sadd.s32 1, %s22
      %p28 = scmp.ge.s32.totalorder %s27, 4
      %s29 = scalar_select %p28, 0, %s27
      %s30 = sadd.s32 1, %s21
      %s31 = scalar_select %p28, %s30, %s21
      %p32 = scmp.ge.s32.totalorder %s31, 2
      %s33 = scalar_select %p32, 0, %s31
      %s34 = ssub.s32 %s22, %s29
      %s35 = ssub.s32 %s21, %s33
      %s36 = sor.u32 %s34, %s35
      %p37 = scmp.eq.s32.totalorder %s36, 0
      %s39 = sadd.s32 %s38, 1
      %s40 = scalar_select %p37, %s38, %s39
      %p43 = pneg %p37
      %p44 = scmp.eq.s32.totalorder %s14, 7
      %p45 = por %p43, %p44
      %p46 = scmp.ne.s32.totalorder %s38, %s41
      %p47 = scmp.eq.s32.totalorder %s14, 0
      %p48 = por %p46, %p47
      %p49 = scmp.ne.s32.totalorder %s38, %s41
      %p50 = scmp.eq.s32.totalorder %s19, 7
      %p51 = por %p49, %p50
      %p52 = scmp.ne.s32.totalorder %s41, %s42
      %p53 = scmp.eq.s32.totalorder %s19, 0
      %p54 = por %p52, %p53
      %p55 = scmp.ne.s32.totalorder %s41, %s42
      %p56 = scmp.eq.s32.totalorder %s20, 7
      %p57 = por %p55, %p56
      %p59 = scmp.ne.s32.totalorder %s42, %s58
      %p60 = scmp.eq.s32.totalorder %s20, 0
      %p61 = por %p59, %p60
      %s62 = ssub.s32 %s22, %s29
      %s63 = ssub.s32 %s21, %s33
      %s64 = sor.u32 %s62, %s63
      %p65 = scmp.eq.s32.totalorder %s64, 0
      %s67 = sadd.s32 %s66, 1
      %s68 = scalar_select %p65, %s66, %s67
      %p71 = pneg %p65
      %p72 = scmp.eq.s32.totalorder %s14, 7
      %p73 = por %p71, %p72
      %p74 = scmp.ne.s32.totalorder %s66, %s69
      %p75 = scmp.eq.s32.totalorder %s14, 0
      %p76 = por %p74, %p75
      %p77 = scmp.ne.s32.totalorder %s66, %s69
      %p78 = scmp.eq.s32.totalorder %s19, 7
      %p79 = por %p77, %p78
      %p80 = scmp.ne.s32.totalorder %s69, %s70
      %p81 = scmp.eq.s32.totalorder %s19, 0
      %p82 = por %p80, %p81
      %p83 = scmp.ne.s32.totalorder %s69, %s70
      %p84 = scmp.eq.s32.totalorder %s20, 7
      %p85 = por %p83, %p84
      %p87 = scmp.ne.s32.totalorder %s70, %s86
      %p88 = scmp.eq.s32.totalorder %s20, 0
      %p89 = por %p87, %p88
      %s90 = ssub.s32 %s22, %s29
      %s91 = ssub.s32 %s21, %s33
      %s92 = sor.u32 %s90, %s91
      %p93 = scmp.eq.s32.totalorder %s92, 0
      %s95 = sadd.s32 %s94, 1
      %s96 = scalar_select %p93, %s94, %s95
      %p99 = pneg %p93
      %p100 = scmp.eq.s32.totalorder %s14, 7
      %p101 = por %p99, %p100
      %p102 = scmp.ne.s32.totalorder %s94, %s97
      %p103 = scmp.eq.s32.totalorder %s14, 0
      %p104 = por %p102, %p103
      %p105 = scmp.ne.s32.totalorder %s94, %s97
      %p106 = scmp.eq.s32.totalorder %s19, 7
      %p107 = por %p105, %p106
      %p108 = scmp.ne.s32.totalorder %s97, %s98
      %p109 = scmp.eq.s32.totalorder %s19, 0
      %p110 = por %p108, %p109
      %p111 = scmp.ne.s32.totalorder %s97, %s98
      %p112 = scmp.eq.s32.totalorder %s20, 7
      %p113 = por %p111, %p112
      %p115 = scmp.ne.s32.totalorder %s98, %s114
      %p116 = scmp.eq.s32.totalorder %s20, 0
      %p117 = por %p115, %p116
      %s118 = ssub.s32 %s22, %s29
      %s119 = ssub.s32 %s21, %s33
      %s120 = sor.u32 %s118, %s119
      %p121 = scmp.eq.s32.totalorder %s120, 0
      %s123 = sadd.s32 %s122, 1
      %s124 = scalar_select %p121, %s122, %s123
      %p127 = pneg %p121
      %p128 = scmp.eq.s32.totalorder %s14, 7
      %p129 = por %p127, %p128
      %p130 = scmp.ne.s32.totalorder %s122, %s125
      %p131 = scmp.eq.s32.totalorder %s14, 0
      %p132 = por %p130, %p131
      %p133 = scmp.ne.s32.totalorder %s122, %s125
      %p134 = scmp.eq.s32.totalorder %s19, 7
      %p135 = por %p133, %p134
      %p136 = scmp.ne.s32.totalorder %s125, %s126
      %p137 = scmp.eq.s32.totalorder %s19, 0
      %p138 = por %p136, %p137
      %p139 = scmp.ne.s32.totalorder %s125, %s126
      %p140 = scmp.eq.s32.totalorder %s20, 7
      %p141 = por %p139, %p140
      %p143 = scmp.ne.s32.totalorder %s126, %s142
      %p144 = scmp.eq.s32.totalorder %s20, 0
      %p145 = por %p143, %p144
      %s146 = ssub.s32 %s21, %s33
      %s147 = ssub.s32 %s22, %s29
      %s148 = sor.u32 %s146, %s147
      %p149 = scmp.eq.s32.totalorder %s148, 0
      %s151 = sadd.s32 %s150, 1
      %s152 = scalar_select %p149, %s150, %s151
      %p155 = pneg %p149
      %p156 = scmp.eq.s32.totalorder %s14, 7
      %p157 = por %p155, %p156
      %p158 = scmp.ne.s32.totalorder %s150, %s153
      %p159 = scmp.eq.s32.totalorder %s14, 0
      %p160 = por %p158, %p159
      %p161 = scmp.ne.s32.totalorder %s150, %s153
      %p162 = scmp.eq.s32.totalorder %s19, 7
      %p163 = por %p161, %p162
      %p164 = scmp.ne.s32.totalorder %s153, %s154
      %p165 = scmp.eq.s32.totalorder %s19, 0
      %p166 = por %p164, %p165
      %p167 = scmp.ne.s32.totalorder %s153, %s154
      %p168 = scmp.eq.s32.totalorder %s20, 7
      %p169 = por %p167, %p168
      %p171 = scmp.ne.s32.totalorder %s154, %s170
      %p172 = scmp.eq.s32.totalorder %s20, 0
      %p173 = por %p171, %p172
      %p174 = scmp.le.s32.totalorder 1, %s14
      %p175 = scmp.lt.s32.totalorder %s14, 9
      %p176 = pnand %p174, %p175
      %p177 = pneg %p176
      // Predicated region
      $region9: #{multi_head_attention.8} parent=5 // pred_check
        _
      $region10: #{multi_head_attention.8} parent=5 // pred_check_branch
        %179 = sbr.rel (%p176) target = $region12
      $region11: #{multi_head_attention.8} parent=5 // pred_region
        %s180 = ssub.s32 %s14, 1
      $region12: #{multi_head_attention.8} parent=5 // pred_fallthru
        _
      %p181 = scmp.lt.s32.totalorder %s14, 8
      // Predicated region
      $region13: #{multi_head_attention.8} parent=5 // pred_check
        %p182 = pneg %p181
      $region14: #{multi_head_attention.8} parent=5 // pred_check_branch
        %184 = sbr.rel (%p182) target = $region16
      $region15: #{multi_head_attention.8} parent=5 // pred_region
        // Predicated region
        $region17: #{multi_head_attention.8} parent=15 // pred_check
          %p185 = pneg %p48
        $region18: #{multi_head_attention.8} parent=15 // pred_check_branch
          %187 = sbr.rel (%p185) target = $region20
        $region19: #{multi_head_attention.8} parent=15 // pred_region
          %p188 = scmp.lt.s32.totalorder %s22, 3
          %s189 = scalar_select %p188, %s22, 3
          %p190 = scmp.lt.s32.totalorder %s21, 1
          %s191 = scalar_select %p190, %s21, 1
          %s192 = smul.addr %s189, 2
          %s193 = sadd.s32 %s191, %s192
          %s194 = smul.addr %s193, 8
          %s195 = scalar_lea.vmem %s0, %s194
        $region20: #{multi_head_attention.8} parent=15 // pred_fallthru
          _
        // Predicated region
        $region21: #{multi_head_attention.8} parent=15 // pred_check
          %p196 = pneg %p76
        $region22: #{multi_head_attention.8} parent=15 // pred_check_branch
          %198 = sbr.rel (%p196) target = $region24
        $region23: #{multi_head_attention.8} parent=15 // pred_region
          %p199 = scmp.lt.s32.totalorder %s22, 3
          %s200 = scalar_select %p199, %s22, 3
          %p201 = scmp.lt.s32.totalorder %s21, 1
          %s202 = scalar_select %p201, %s21, 1
          %s203 = smul.addr %s200, 2
          %s204 = sadd.s32 %s202, %s203
          %s205 = smul.addr %s204, 8
          %s206 = scalar_lea.vmem %s1, %s205
        $region24: #{multi_head_attention.8} parent=15 // pred_fallthru
          _
        // Predicated region
        $region25: #{multi_head_attention.8} parent=15 // pred_check
          %p207 = pneg %p104
        $region26: #{multi_head_attention.8} parent=15 // pred_check_branch
          %209 = sbr.rel (%p207) target = $region28
        $region27: #{multi_head_attention.8} parent=15 // pred_region
          %p210 = scmp.lt.s32.totalorder %s22, 3
          %s211 = scalar_select %p210, %s22, 3
          %p212 = scmp.lt.s32.totalorder %s21, 1
          %s213 = scalar_select %p212, %s21, 1
          %s214 = smul.addr %s211, 2
          %s215 = sadd.s32 %s213, %s214
          %s216 = smul.addr %s215, 8
          %s217 = scalar_lea.vmem %s2, %s216
        $region28: #{multi_head_attention.8} parent=15 // pred_fallthru
          _
      $region16: #{multi_head_attention.8} parent=5 // pred_fallthru
        _
      %p218 = scmp.le.s32.totalorder 1, %s14
      %p219 = scmp.lt.s32.totalorder %s14, 9
      %p220 = pnand %p218, %p219
      %p221 = pneg %p220
      // Predicated region
      $region29: #{multi_head_attention.8} parent=5 // pred_check
        _
      $region30: #{multi_head_attention.8} parent=5 // pred_check_branch
        %223 = sbr.rel (%p220) target = $region32
      $region31: #{multi_head_attention.8} parent=5 // pred_region
        %s224 = ssub.s32 %s14, 1
        %p225 = scmp.lt.s32.totalorder %s24, 3
        %s226 = scalar_select %p225, %s24, 3
        %p227 = scmp.lt.s32.totalorder %s23, 1
        %s228 = scalar_select %p227, %s23, 1
        %s229 = smul.addr %s226, 2
        %s230 = sadd.s32 %s228, %s229
        %s231 = smul.addr %s230, 8
        %s232 = scalar_lea.vmem %s0, %s231
        %p233 = pneg %p54
        %p234 = pneg %p51
        %p235 = scmp.lt.s32.totalorder %s24, 3
        %s236 = scalar_select %p235, %s24, 3
        %p237 = scmp.lt.s32.totalorder %s23, 1
        %s238 = scalar_select %p237, %s23, 1
        %s239 = smul.addr %s236, 2
        %s240 = sadd.s32 %s238, %s239
        %s241 = smul.addr %s240, 8
        %s242 = scalar_lea.vmem %s1, %s241
        %p243 = pneg %p82
        %p244 = pneg %p79
        %p245 = scmp.lt.s32.totalorder %s24, 3
        %s246 = scalar_select %p245, %s24, 3
        %p247 = scmp.lt.s32.totalorder %s23, 1
        %s248 = scalar_select %p247, %s23, 1
        %s249 = smul.addr %s246, 2
        %s250 = sadd.s32 %s248, %s249
        %s251 = smul.addr %s250, 8
        %s252 = scalar_lea.vmem %s2, %s251
        %p253 = pneg %p110
        %p254 = pneg %p107
        %p255 = pneg %p138
        %p256 = pneg %p135
        %p257 = scmp.lt.s32.totalorder %s24, 3
        %s258 = scalar_select %p257, %s24, 3
        %p259 = scmp.lt.s32.totalorder %s23, 1
        %s260 = scalar_select %p259, %s23, 1
        %s261 = smul.addr %s258, 2
        %s262 = sadd.s32 %s260, %s261
        %s263 = smul.addr %s262, 8
        %s264 = scalar_lea.vmem %s3, %s263
        %p265 = pneg %p166
        %p266 = pneg %p163
        %s267 = sand.u32 %s153, 1
        %s268 = scalar_lea.sflag [#allocation3], %s267
        %s269 = sand.u32 %s153, 1
        %s270 = smul.addr %s269, 8
        %s271 = scalar_lea.vmem [#allocation2], %s270
        %p272 = scmp.lt.s32.totalorder %s24, 3
        %s273 = scalar_select %p272, %s24, 3
        %p274 = scmp.lt.s32.totalorder %s23, 1
        %s275 = scalar_select %p274, %s23, 1
        %s276 = smul.addr %s273, 2
        %s277 = sadd.s32 %s275, %s276
        %s278 = smul.addr %s277, 8
        %s279 = scalar_lea.vmem %s0, %s278
        %p280 = scmp.lt.s32.totalorder %s24, 3
        %s281 = scalar_select %p280, %s24, 3
        %p282 = scmp.lt.s32.totalorder %s23, 1
        %s283 = scalar_select %p282, %s23, 1
        %s284 = smul.addr %s281, 2
        %s285 = sadd.s32 %s283, %s284
        %s286 = smul.addr %s285, 8
        %s287 = scalar_lea.vmem %s1, %s286
        %p288 = scmp.lt.s32.totalorder %s24, 3
        %s289 = scalar_select %p288, %s24, 3
        %p290 = scmp.lt.s32.totalorder %s23, 1
        %s291 = scalar_select %p290, %s23, 1
        %s292 = smul.addr %s289, 2
        %s293 = sadd.s32 %s291, %s292
        %s294 = smul.addr %s293, 8
        %s295 = scalar_lea.vmem %s2, %s294
        %p296 = scmp.lt.s32.totalorder %s24, 3
        %s297 = scalar_select %p296, %s24, 3
        %p298 = scmp.lt.s32.totalorder %s23, 1
        %s299 = scalar_select %p298, %s23, 1
        %s300 = smul.addr %s297, 2
        %s301 = sadd.s32 %s299, %s300
        %s302 = smul.addr %s301, 8
        %s303 = scalar_lea.vmem %s3, %s302
        %v304 = vld [vmem:[%s279] sm:$0xff]
        %v305 = vmul.f32 %v304, 0.35355338
        %v306 = vld [vmem:[%s287] sm:$0xff]
        %v307 = vld [vmem:[%s295] sm:$0xff]
        %vm308 = vcmask 64512
        %v310 = vsel %vm308, %v305, 0
        %v313 = vsel %vm308, %v306, 0
        %315 = vmatprep.subr.mxu0 0.0
        %316 = vmatpush1.xpose.msra.mxu0 0.0
        %317 = vmatprep.subr.mxu0 0.0
        %318 = vmatpush1.xpose.msra.mxu0 0.0
        %319 = vmatprep.subr.mxu0 0.0
        %320 = vmatpush1.xpose.msra.mxu0 0.0
        %321 = vmatprep.subr.mxu0 0.0
        %322 = vmatpush1.xpose.msra.mxu0 0.0
        %323 = vmatprep.subr.mxu0 0.0
        %324 = vmatpush1.xpose.msra.mxu0 0.0
        %325 = vmatprep.subr.mxu0 0.0
        %326 = vmatpush1.xpose.msra.mxu0 0.0
        %327 = vmatprep.subr.mxu0 0.0
        %328 = vmatpush1.xpose.msra.mxu0 0.0
        %329 = vmatprep.subr.mxu0 0.0
        %330 = vmatpush1.xpose.msra.mxu0 0.0
        %331 = vmatprep.subr.mxu0 0.0
        %332 = vmatpush1.xpose.msra.mxu0 0.0
        %333 = vmatprep.subr.mxu0 0.0
        %334 = vmatpush1.xpose.msra.mxu0 0.0
        %335 = vmatprep.subr.mxu0 0.0
        %336 = vmatpush1.xpose.msra.mxu0 0.0
        %337 = vmatprep.subr.mxu0 0.0
        %338 = vmatpush1.xpose.msra.mxu0 0.0
        %339 = vmatprep.subr.mxu0 0.0
        %340 = vmatpush1.xpose.msra.mxu0 0.0
        %341 = vmatprep.subr.mxu0 0.0
        %342 = vmatpush1.xpose.msra.mxu0 0.0
        %343 = vmatprep.subr.mxu0 0.0
        %344 = vmatpush1.xpose.msra.mxu0 0.0
        %345 = vmatprep.subr.mxu0 0.0
        %346 = vmatpush1.xpose.msra.mxu0 %v313
        %347 = vmatprep.subr.mxu0 0.0
        %348 = vmatpush2.xpose.msra.mxu0 0.0
        %349 = vmatprep.subr.mxu0 0.0
        %350 = vmatpush2.xpose.msra.mxu0 0.0
        %351 = vmatprep.subr.mxu0 0.0
        %352 = vmatpush2.xpose.msra.mxu0 0.0
        %353 = vmatprep.subr.mxu0 0.0
        %354 = vmatpush2.xpose.msra.mxu0 0.0
        %355 = vmatprep.subr.mxu0 0.0
        %356 = vmatpush2.xpose.msra.mxu0 0.0
        %357 = vmatprep.subr.mxu0 0.0
        %358 = vmatpush2.xpose.msra.mxu0 0.0
        %359 = vmatprep.subr.mxu0 0.0
        %360 = vmatpush2.xpose.msra.mxu0 0.0
        %361 = vmatprep.subr.mxu0 0.0
        %362 = vmatpush2.xpose.msra.mxu0 0.0
        %363 = vmatprep.subr.mxu0 0.0
        %364 = vmatpush2.xpose.msra.mxu0 0.0
        %365 = vmatprep.subr.mxu0 0.0
        %366 = vmatpush2.xpose.msra.mxu0 0.0
        %367 = vmatprep.subr.mxu0 0.0
        %368 = vmatpush2.xpose.msra.mxu0 0.0
        %369 = vmatprep.subr.mxu0 0.0
        %370 = vmatpush2.xpose.msra.mxu0 0.0
        %371 = vmatprep.subr.mxu0 0.0
        %372 = vmatpush2.xpose.msra.mxu0 0.0
        %373 = vmatprep.subr.mxu0 0.0
        %374 = vmatpush2.xpose.msra.mxu0 0.0
        %375 = vmatprep.subr.mxu0 0.0
        %376 = vmatpush2.xpose.msra.mxu0 0.0
        %377 = vmatprep.subr.mxu0 0.0
        %378 = vmatpush2.xpose.msra.mxu0 0.0
        %379 = vmatprep.mubr.f32.mxu0 0.0
        %380 = vmatmul.mubr.f32.gmra.mxu0 %v310
        %v381 = vpop.f32.mrf.mxu0
        %v382 = vadd.f32 0.0, %v381
        %v383 = vpop.f32.mrf.mxu0
        %384 = vdwg.mxu0
        %v385 = vsel %vm308, %v382, -inf
        %386 = vmax.xlane.f32.xlu0 %v385
        %v387 = vpop.xlane.xlu0 %386
        %v388 = vsub.f32 %v382, %v387
        %v389 = vmul.f32 %v388, 1.442695
        %v390 = vpow.pop %v389
        %v391 = vsel %vm308, %v390, 0.0
        %392 = vadd.xlane.f32.xlu0 %v391
        %v393 = vpop.xlane.xlu0 %392
        %v394 = vrcp.pop %v393
        %v395 = vmul.f32 %v390, %v394
        %396 = vst.msk [vmem:[%s271] sm:$0xff] %vm308, %v395
        %v398 = vsel %vm308, %v395, 0
        %400 = vmatprep.subr.mxu0 0.0
        %401 = vmatpush1.msra.mxu0 0.0
        %402 = vmatprep.subr.mxu0 0.0
        %403 = vmatpush1.msra.mxu0 0.0
        %404 = vmatprep.subr.mxu0 0.0
        %405 = vmatpush1.msra.mxu0 0.0
        %406 = vmatprep.subr.mxu0 0.0
        %407 = vmatpush1.msra.mxu0 0.0
        %408 = vmatprep.subr.mxu0 0.0
        %409 = vmatpush1.msra.mxu0 0.0
        %410 = vmatprep.subr.mxu0 0.0
        %411 = vmatpush1.msra.mxu0 0.0
        %412 = vmatprep.subr.mxu0 0.0
        %413 = vmatpush1.msra.mxu0 0.0
        %414 = vmatprep.subr.mxu0 0.0
        %415 = vmatpush1.msra.mxu0 0.0
        %416 = vmatprep.subr.mxu0 0.0
        %417 = vmatpush1.msra.mxu0 0.0
        %418 = vmatprep.subr.mxu0 0.0
        %419 = vmatpush1.msra.mxu0 0.0
        %420 = vmatprep.subr.mxu0 0.0
        %421 = vmatpush1.msra.mxu0 0.0
        %422 = vmatprep.subr.mxu0 0.0
        %423 = vmatpush1.msra.mxu0 0.0
        %424 = vmatprep.subr.mxu0 0.0
        %425 = vmatpush1.msra.mxu0 0.0
        %426 = vmatprep.subr.mxu0 0.0
        %427 = vmatpush1.msra.mxu0 0.0
        %428 = vmatprep.subr.mxu0 0.0
        %429 = vmatpush1.msra.mxu0 0.0
        %430 = vmatprep.subr.mxu0 0.0
        %431 = vmatpush1.msra.mxu0 %v307
        %432 = vmatprep.subr.mxu0 0.0
        %433 = vmatpush2.msra.mxu0 0.0
        %434 = vmatprep.subr.mxu0 0.0
        %435 = vmatpush2.msra.mxu0 0.0
        %436 = vmatprep.subr.mxu0 0.0
        %437 = vmatpush2.msra.mxu0 0.0
        %438 = vmatprep.subr.mxu0 0.0
        %439 = vmatpush2.msra.mxu0 0.0
        %440 = vmatprep.subr.mxu0 0.0
        %441 = vmatpush2.msra.mxu0 0.0
        %442 = vmatprep.subr.mxu0 0.0
        %443 = vmatpush2.msra.mxu0 0.0
        %444 = vmatprep.subr.mxu0 0.0
        %445 = vmatpush2.msra.mxu0 0.0
        %446 = vmatprep.subr.mxu0 0.0
        %447 = vmatpush2.msra.mxu0 0.0
        %448 = vmatprep.subr.mxu0 0.0
        %449 = vmatpush2.msra.mxu0 0.0
        %450 = vmatprep.subr.mxu0 0.0
        %451 = vmatpush2.msra.mxu0 0.0
        %452 = vmatprep.subr.mxu0 0.0
        %453 = vmatpush2.msra.mxu0 0.0
        %454 = vmatprep.subr.mxu0 0.0
        %455 = vmatpush2.msra.mxu0 0.0
        %456 = vmatprep.subr.mxu0 0.0
        %457 = vmatpush2.msra.mxu0 0.0
        %458 = vmatprep.subr.mxu0 0.0
        %459 = vmatpush2.msra.mxu0 0.0
        %460 = vmatprep.subr.mxu0 0.0
        %461 = vmatpush2.msra.mxu0 0.0
        %462 = vmatprep.subr.mxu0 0.0
        %463 = vmatpush2.msra.mxu0 0.0
        %464 = vmatprep.mubr.f32.mxu0 0.0
        %465 = vmatmul.mubr.f32.gmra.mxu0 %v398
        %v466 = vpop.f32.mrf.mxu0
        %v467 = vadd.f32 0.0, %v466
        %v468 = vpop.f32.mrf.mxu0
        %469 = vdwg.mxu0
        %470 = vst.msk [vmem:[%s303] sm:$0xff] %vm308, %v467
        %p471 = scmp.lt.s32.totalorder %s24, 3
        %s472 = scalar_select %p471, %s24, 3
        %p473 = scmp.lt.s32.totalorder %s23, 1
        %s474 = scalar_select %p473, %s23, 1
        %s475 = smul.addr %s472, 2
        %s476 = sadd.s32 %s474, %s475
        %s477 = smul.addr %s476, 8
        %s478 = scalar_lea.vmem %s3, %s477
        %s479 = sand.u32 %s153, 1
        %s480 = scalar_lea.sflag [#allocation3], %s479
        %s481 = sand.u32 %s153, 1
        %s482 = smul.addr %s481, 8
        %s483 = scalar_lea.vmem [#allocation2], %s482
        // Predicated region
        $region33: #{multi_head_attention.8} parent=31 // pred_check
          %p484 = pneg %p135
        $region34: #{multi_head_attention.8} parent=31 // pred_check_branch
          %486 = sbr.rel (%p484) target = $region36
        $region35: #{multi_head_attention.8} parent=31 // pred_region
          _
        $region36: #{multi_head_attention.8} parent=31 // pred_fallthru
          _
        // Predicated region
        $region37: #{multi_head_attention.8} parent=31 // pred_check
          %p487 = pneg %p163
        $region38: #{multi_head_attention.8} parent=31 // pred_check_branch
          %489 = sbr.rel (%p487) target = $region40
        $region39: #{multi_head_attention.8} parent=31 // pred_region
          %s491 = ssub.s32 128, 128
          %492 = vsyncadd %s480, %s491
          %s493 = smul.addr %s23, 4
          %s494 = sadd.s32 %s24, %s493
          %s495 = smul.addr %s494, 128
          %s496 = scalar_lea.hbm %s4, %s495
          %s498 = sshll.u32 %s483, 4
          %s499 = int_to_ptr.vmem [resolvable:$true] %s498
          %501 = dma.vmem_to_hbm [thread:$0]  %s499, 128, %s496, %s480
        $region40: #{multi_head_attention.8} parent=31 // pred_fallthru
          _
      $region32: #{multi_head_attention.8} parent=5 // pred_fallthru
        _
      %p502 = scmp.le.s32.totalorder 2, %s14
      // Predicated region
      $region41: #{multi_head_attention.8} parent=5 // pred_check
        %p503 = pneg %p502
      $region42: #{multi_head_attention.8} parent=5 // pred_check_branch
        %505 = sbr.rel (%p503) target = $region44
      $region43: #{multi_head_attention.8} parent=5 // pred_region
        %s506 = ssub.s32 %s14, 2
        // Predicated region
        $region45: #{multi_head_attention.8} parent=43 // pred_check
          %p507 = pneg %p141
        $region46: #{multi_head_attention.8} parent=43 // pred_check_branch
          %509 = sbr.rel (%p507) target = $region48
        $region47: #{multi_head_attention.8} parent=43 // pred_region
          %p510 = scmp.lt.s32.totalorder %s26, 3
          %s511 = scalar_select %p510, %s26, 3
          %p512 = scmp.lt.s32.totalorder %s25, 1
          %s513 = scalar_select %p512, %s25, 1
          %s514 = smul.addr %s511, 2
          %s515 = sadd.s32 %s513, %s514
          %s516 = smul.addr %s515, 8
          %s517 = scalar_lea.vmem %s3, %s516
        $region48: #{multi_head_attention.8} parent=43 // pred_fallthru
          _
        // Predicated region
        $region49: #{multi_head_attention.8} parent=43 // pred_check
          %p518 = pneg %p169
        $region50: #{multi_head_attention.8} parent=43 // pred_check_branch
          %520 = sbr.rel (%p518) target = $region52
        $region51: #{multi_head_attention.8} parent=43 // pred_region
          %s521 = sand.u32 %s154, 1
          %s522 = scalar_lea.sflag [#allocation3], %s521
          %s523 = sand.u32 %s154, 1
          %s524 = smul.addr %s523, 8
          %s525 = scalar_lea.vmem [#allocation2], %s524
          %526 = dma.done %s522, 128
        $region52: #{multi_head_attention.8} parent=43 // pred_fallthru
          _
      $region44: #{multi_head_attention.8} parent=5 // pred_fallthru
        _
    $region6: #{multi_head_attention.8} parent=1 // loop_footer
      %s18 = sadd.s32 1, %s14
    $region7: #{multi_head_attention.8} parent=1 // loop_footer_branch
      %13 = sbr.rel target = $region3
    $region8: #{multi_head_attention.8} parent=1 // loop_exit
      _
    %527 = vsyncpa [#allocation3], 1
    %s528 = scalar_lea.sflag [#allocation3], 1
    %529 = vsyncpa %s528, 1

// kernel: multi_head_attention.9
$region0: #{multi_head_attention.9}
  #allocation0 [shape = 'u32[]', space=smem, size = 0x4, offset = 0x4, fixed_abs, tag = 'smem constant byte address 0x4 - core index']
  #allocation1 [shape = 'u32[144,128]{1,0:T(1,128)}', space=vmem, size = 0x12000, scoped, tag = 'internal scratch']
  #allocation2 [shape = 'f32[16,32]{1,0:T(8,128)}', space=vmem, size = 0x2000, scoped, tag = 'scratch operand']
  %s0 = inlined_call_operand.vmem [shape: f32[4,16,8], index: 0, kind: input, shape index: {}]
  %s1 = inlined_call_operand.vmem [shape: f32[4,8,32], index: 1, kind: input, shape index: {}]
  %s2 = inlined_call_operand.vmem [shape: f32[1,32], index: 2, kind: input, shape index: {}]
  %s3 = inlined_call_operand.hbm [shape: f32[16,32], index: 3, kind: output, shape index: {}]
  %s4 = sld [smem:[#allocation0]]
  $region53: #{multi_head_attention.9} parent=0
    _
  %s6 = ssub.s32 1, %s4
  %s7 = scalar_select 0, %s6, %s4
  $region1: #{multi_head_attention.9} parent=0
    #allocation3 [shape = 'u8[8192]{0}', space=vmem, size = 0x2000, scoped, tag = 'output window, operand 0, single buffered']
    #allocation4 [shape = 's32[2]{0}', space=sflag, size = 0x8, scoped, tag = 'scoped memory for multi_head_attention.9']
    %8 = vsyncpa [#allocation4], 0
    loop: start=0, step=1, limit=6
    $region2: #{multi_head_attention.9} parent=1 // loop_pre_header
      _
    $region3: #{multi_head_attention.9} parent=1 // loop_header
      %s10 = sphi 0, %s14
      %p11 = scmp.ge.s32.totalorder %s10, 6
      %s17 = sphi 0, %s36
      %s18 = sphi 0, %s32
      %s19 = sphi 0, %s28
      %s20 = sphi 0, %s17
      %s21 = sphi 0, %s18
      %s22 = sphi 0, %s19
      %s23 = sphi 0, %s20
      %s24 = sphi 0, %s21
      %s25 = sphi 0, %s22
      %s41 = sphi 0, %s43
      %s44 = sphi 0, %s41
      %s45 = sphi 0, %s44
      %s61 = sphi 0, %s45
      %s69 = sphi 0, %s71
      %s72 = sphi 0, %s69
      %s73 = sphi 0, %s72
      %s89 = sphi 0, %s73
      %s95 = sphi 0, %s97
      %s98 = sphi 0, %s95
      %s99 = sphi 0, %s98
      %s115 = sphi 0, %s99
      %s123 = sphi 0, %s125
      %s126 = sphi 0, %s123
      %s127 = sphi 0, %s126
      %s143 = sphi 0, %s127
    $region4: #{multi_head_attention.9} parent=1 // loop_header_branch
      %13 = sbr.rel (%p11) target = $region8
    $region5: #{multi_head_attention.9} parent=1 // loop_body
      %s15 = ssub.s32 %s10, 1
      %s16 = ssub.s32 %s10, 2
      %s26 = sadd.s32 1, %s19
      %p27 = scmp.ge.s32.totalorder %s26, 4
      %s28 = scalar_select %p27, 0, %s26
      %s29 = sadd.s32 1, %s18
      %s30 = scalar_select %p27, %s29, %s18
      %p31 = scmp.ge.s32.totalorder %s30, 1
      %s32 = scalar_select %p31, 0, %s30
      %s33 = sadd.s32 1, %s17
      %s34 = scalar_select %p31, %s33, %s17
      %p35 = scmp.ge.s32.totalorder %s34, 1
      %s36 = scalar_select %p35, 0, %s34
      %s37 = ssub.s32 %s19, %s28
      %s38 = ssub.s32 %s17, %s36
      %s39 = sor.u32 %s37, %s38
      %p40 = scmp.eq.s32.totalorder %s39, 0
      %s42 = sadd.s32 %s41, 1
      %s43 = scalar_select %p40, %s41, %s42
      %p46 = pneg %p40
      %p47 = scmp.eq.s32.totalorder %s10, 3
      %p48 = por %p46, %p47
      %p49 = scmp.ne.s32.totalorder %s41, %s44
      %p50 = scmp.eq.s32.totalorder %s10, 0
      %p51 = por %p49, %p50
      %p52 = scmp.ne.s32.totalorder %s41, %s44
      %p53 = scmp.eq.s32.totalorder %s15, 3
      %p54 = por %p52, %p53
      %p55 = scmp.ne.s32.totalorder %s44, %s45
      %p56 = scmp.eq.s32.totalorder %s15, 0
      %p57 = por %p55, %p56
      %p58 = scmp.ne.s32.totalorder %s44, %s45
      %p59 = scmp.eq.s32.totalorder %s16, 3
      %p60 = por %p58, %p59
      %p62 = scmp.ne.s32.totalorder %s45, %s61
      %p63 = scmp.eq.s32.totalorder %s16, 0
      %p64 = por %p62, %p63
      %s65 = ssub.s32 %s19, %s28
      %s66 = ssub.s32 %s18, %s32
      %s67 = sor.u32 %s65, %s66
      %p68 = scmp.eq.s32.totalorder %s67, 0
      %s70 = sadd.s32 %s69, 1
      %s71 = scalar_select %p68, %s69, %s70
      %p74 = pneg %p68
      %p75 = scmp.eq.s32.totalorder %s10, 3
      %p76 = por %p74, %p75
      %p77 = scmp.ne.s32.totalorder %s69, %s72
      %p78 = scmp.eq.s32.totalorder %s10, 0
      %p79 = por %p77, %p78
      %p80 = scmp.ne.s32.totalorder %s69, %s72
      %p81 = scmp.eq.s32.totalorder %s15, 3
      %p82 = por %p80, %p81
      %p83 = scmp.ne.s32.totalorder %s72, %s73
      %p84 = scmp.eq.s32.totalorder %s15, 0
      %p85 = por %p83, %p84
      %p86 = scmp.ne.s32.totalorder %s72, %s73
      %p87 = scmp.eq.s32.totalorder %s16, 3
      %p88 = por %p86, %p87
      %p90 = scmp.ne.s32.totalorder %s73, %s89
      %p91 = scmp.eq.s32.totalorder %s16, 0
      %p92 = por %p90, %p91
      %s93 = ssub.s32 %s18, %s32
      %p94 = scmp.eq.s32.totalorder %s93, 0
      %s96 = sadd.s32 %s95, 1
      %s97 = scalar_select %p94, %s95, %s96
      %p100 = pneg %p94
      %p101 = scmp.eq.s32.totalorder %s10, 3
      %p102 = por %p100, %p101
      %p103 = scmp.ne.s32.totalorder %s95, %s98
      %p104 = scmp.eq.s32.totalorder %s10, 0
      %p105 = por %p103, %p104
      %p106 = scmp.ne.s32.totalorder %s95, %s98
      %p107 = scmp.eq.s32.totalorder %s15, 3
      %p108 = por %p106, %p107
      %p109 = scmp.ne.s32.totalorder %s98, %s99
      %p110 = scmp.eq.s32.totalorder %s15, 0
      %p111 = por %p109, %p110
      %p112 = scmp.ne.s32.totalorder %s98, %s99
      %p113 = scmp.eq.s32.totalorder %s16, 3
      %p114 = por %p112, %p113
      %p116 = scmp.ne.s32.totalorder %s99, %s115
      %p117 = scmp.eq.s32.totalorder %s16, 0
      %p118 = por %p116, %p117
      %s119 = ssub.s32 %s17, %s36
      %s120 = ssub.s32 %s18, %s32
      %s121 = sor.u32 %s119, %s120
      %p122 = scmp.eq.s32.totalorder %s121, 0
      %s124 = sadd.s32 %s123, 1
      %s125 = scalar_select %p122, %s123, %s124
      %p128 = pneg %p122
      %p129 = scmp.eq.s32.totalorder %s10, 3
      %p130 = por %p128, %p129
      %p131 = scmp.ne.s32.totalorder %s123, %s126
      %p132 = scmp.eq.s32.totalorder %s10, 0
      %p133 = por %p131, %p132
      %p134 = scmp.ne.s32.totalorder %s123, %s126
      %p135 = scmp.eq.s32.totalorder %s15, 3
      %p136 = por %p134, %p135
      %p137 = scmp.ne.s32.totalorder %s126, %s127
      %p138 = scmp.eq.s32.totalorder %s15, 0
      %p139 = por %p137, %p138
      %p140 = scmp.ne.s32.totalorder %s126, %s127
      %p141 = scmp.eq.s32.totalorder %s16, 3
      %p142 = por %p140, %p141
      %p144 = scmp.ne.s32.totalorder %s127, %s143
      %p145 = scmp.eq.s32.totalorder %s16, 0
      %p146 = por %p144, %p145
      %p147 = scmp.le.s32.totalorder 1, %s10
      %p148 = scmp.lt.s32.totalorder %s10, 5
      %p149 = pnand %p147, %p148
      %p150 = pneg %p149
      // Predicated region
      $region9: #{multi_head_attention.9} parent=5 // pred_check
        _
      $region10: #{multi_head_attention.9} parent=5 // pred_check_branch
        %152 = sbr.rel (%p149) target = $region12
      $region11: #{multi_head_attention.9} parent=5 // pred_region
        %s153 = ssub.s32 %s10, 1
        // Predicated region
        $region13: #{multi_head_attention.9} parent=11 // pred_check
          %p154 = pneg %p111
        $region14: #{multi_head_attention.9} parent=11 // pred_check_branch
          %156 = sbr.rel (%p154) target = $region16
        $region15: #{multi_head_attention.9} parent=11 // pred_region
          %p157 = scmp.lt.s32.totalorder %s21, 0
          %s158 = scalar_select %p157, %s21, 0
          %s159 = scalar_lea.vmem %s2, %s158
        $region16: #{multi_head_attention.9} parent=11 // pred_fallthru
          _
      $region12: #{multi_head_attention.9} parent=5 // pred_fallthru
        _
      %p160 = scmp.lt.s32.totalorder %s10, 4
      // Predicated region
      $region17: #{multi_head_attention.9} parent=5 // pred_check
        %p161 = pneg %p160
      $region18: #{multi_head_attention.9} parent=5 // pred_check_branch
        %163 = sbr.rel (%p161) target = $region20
      $region19: #{multi_head_attention.9} parent=5 // pred_region
        // Predicated region
        $region21: #{multi_head_attention.9} parent=19 // pred_check
          %p164 = pneg %p51
        $region22: #{multi_head_attention.9} parent=19 // pred_check_branch
          %166 = sbr.rel (%p164) target = $region24
        $region23: #{multi_head_attention.9} parent=19 // pred_region
          %s167 = smul.u32 2, %s17
          %p168 = scmp.lt.s32.totalorder %s19, 3
          %s169 = scalar_select %p168, %s19, 3
          %p170 = scmp.lt.s32.totalorder %s167, 1
          %s171 = scalar_select %p170, %s167, 1
          %s172 = smul.addr %s169, 2
          %s173 = sadd.s32 %s171, %s172
          %s174 = smul.addr %s173, 8
          %s175 = scalar_lea.vmem %s0, %s174
          %s176 = smul.u32 2, %s17
        $region24: #{multi_head_attention.9} parent=19 // pred_fallthru
          _
        // Predicated region
        $region25: #{multi_head_attention.9} parent=19 // pred_check
          %p177 = pneg %p79
        $region26: #{multi_head_attention.9} parent=19 // pred_check_branch
          %179 = sbr.rel (%p177) target = $region28
        $region27: #{multi_head_attention.9} parent=19 // pred_region
          %p180 = scmp.lt.s32.totalorder %s19, 3
          %s181 = scalar_select %p180, %s19, 3
          %p182 = scmp.lt.s32.totalorder %s18, 0
          %s183 = scalar_select %p182, %s18, 0
          %s184 = sadd.s32 %s183, %s181
          %s185 = smul.addr %s184, 8
          %s186 = scalar_lea.vmem %s1, %s185
        $region28: #{multi_head_attention.9} parent=19 // pred_fallthru
          _
      $region20: #{multi_head_attention.9} parent=5 // pred_fallthru
        _
      %p187 = scmp.le.s32.totalorder 1, %s10
      %p188 = scmp.lt.s32.totalorder %s10, 5
      %p189 = pnand %p187, %p188
      %p190 = pneg %p189
      // Predicated region
      $region29: #{multi_head_attention.9} parent=5 // pred_check
        _
      $region30: #{multi_head_attention.9} parent=5 // pred_check_branch
        %192 = sbr.rel (%p189) target = $region32
      $region31: #{multi_head_attention.9} parent=5 // pred_region
        %s193 = ssub.s32 %s10, 1
        %s194 = smul.u32 2, %s20
        %p195 = scmp.lt.s32.totalorder %s22, 3
        %s196 = scalar_select %p195, %s22, 3
        %p197 = scmp.lt.s32.totalorder %s194, 1
        %s198 = scalar_select %p197, %s194, 1
        %s199 = smul.addr %s196, 2
        %s200 = sadd.s32 %s198, %s199
        %s201 = smul.addr %s200, 8
        %s202 = scalar_lea.vmem %s0, %s201
        %p203 = pneg %p57
        %p204 = pneg %p54
        %p205 = scmp.lt.s32.totalorder %s22, 3
        %s206 = scalar_select %p205, %s22, 3
        %p207 = scmp.lt.s32.totalorder %s21, 0
        %s208 = scalar_select %p207, %s21, 0
        %s209 = sadd.s32 %s208, %s206
        %s210 = smul.addr %s209, 8
        %s211 = scalar_lea.vmem %s1, %s210
        %p212 = pneg %p85
        %p213 = pneg %p82
        %p214 = scmp.lt.s32.totalorder %s21, 0
        %s215 = scalar_select %p214, %s21, 0
        %s216 = scalar_lea.vmem %s2, %s215
        %p217 = pneg %p111
        %p218 = pneg %p108
        %p219 = pneg %p139
        %p220 = pneg %p136
        %s221 = smul.u32 2, %s20
        %p222 = scmp.lt.s32.totalorder %s22, 3
        %s223 = scalar_select %p222, %s22, 3
        %p224 = scmp.lt.s32.totalorder %s221, 1
        %s225 = scalar_select %p224, %s221, 1
        %s226 = smul.addr %s223, 2
        %s227 = sadd.s32 %s225, %s226
        %s228 = smul.addr %s227, 8
        %s229 = scalar_lea.vmem %s0, %s228
        %s230 = smul.u32 2, %s20
        %p231 = scmp.lt.s32.totalorder %s22, 3
        %s232 = scalar_select %p231, %s22, 3
        %p233 = scmp.lt.s32.totalorder %s21, 0
        %s234 = scalar_select %p233, %s21, 0
        %s235 = sadd.s32 %s234, %s232
        %s236 = smul.addr %s235, 8
        %s237 = scalar_lea.vmem %s1, %s236
        %p238 = scmp.lt.s32.totalorder %s21, 0
        %s239 = scalar_select %p238, %s21, 0
        %s240 = scalar_lea.vmem %s2, %s239
        %s241 = smul.u32 2, %s20
        %p242 = scmp.eq.s32.totalorder %s22, 0
        // Predicated region
        $region33: #{multi_head_attention.9} parent=31 // pred_check
          %p243 = pneg %p242
        $region34: #{multi_head_attention.9} parent=31 // pred_check_branch
          %245 = sbr.rel (%p243) target = $region36
        $region35: #{multi_head_attention.9} parent=31 // pred_region
          %vm246 = vcmask 261120
          %247 = vst.msk [vmem:[#allocation2] sm:$0xff] %vm246, 0.0
          %248 = vst.msk [vmem:[#allocation2 + $0x8] sm:$0xff] %vm246, 0.0
        $region36: #{multi_head_attention.9} parent=31 // pred_fallthru
          _
        %v249 = vld [vmem:[#allocation2] sm:$0xff]
        %v250 = vld [vmem:[#allocation2 + $0x8] sm:$0xff]
        %v251 = vld [vmem:[%s229] sm:$0xff]
        %v252 = vld [vmem:[%s229 + $0x8] sm:$0xff]
        %v253 = vld [vmem:[%s237] sm:$0xff]
        %vm254 = vcmask 64512
        %v256 = vsel %vm254, %v251, 0
        %v259 = vsel %vm254, %v252, 0
        %261 = vmatprep.subr.mxu0 0.0
        %262 = vmatpush1.msra.mxu0 0.0
        %263 = vmatprep.subr.mxu0 0.0
        %264 = vmatpush1.msra.mxu0 0.0
        %265 = vmatprep.subr.mxu0 0.0
        %266 = vmatpush1.msra.mxu0 0.0
        %267 = vmatprep.subr.mxu0 0.0
        %268 = vmatpush1.msra.mxu0 0.0
        %269 = vmatprep.subr.mxu0 0.0
        %270 = vmatpush1.msra.mxu0 0.0
        %271 = vmatprep.subr.mxu0 0.0
        %272 = vmatpush1.msra.mxu0 0.0
        %273 = vmatprep.subr.mxu0 0.0
        %274 = vmatpush1.msra.mxu0 0.0
        %275 = vmatprep.subr.mxu0 0.0
        %276 = vmatpush1.msra.mxu0 0.0
        %277 = vmatprep.subr.mxu0 0.0
        %278 = vmatpush1.msra.mxu0 0.0
        %279 = vmatprep.subr.mxu0 0.0
        %280 = vmatpush1.msra.mxu0 0.0
        %281 = vmatprep.subr.mxu0 0.0
        %282 = vmatpush1.msra.mxu0 0.0
        %283 = vmatprep.subr.mxu0 0.0
        %284 = vmatpush1.msra.mxu0 0.0
        %285 = vmatprep.subr.mxu0 0.0
        %286 = vmatpush1.msra.mxu0 0.0
        %287 = vmatprep.subr.mxu0 0.0
        %288 = vmatpush1.msra.mxu0 0.0
        %289 = vmatprep.subr.mxu0 0.0
        %290 = vmatpush1.msra.mxu0 0.0
        %291 = vmatprep.subr.mxu0 0.0
        %292 = vmatpush1.msra.mxu0 %v253
        %293 = vmatprep.subr.mxu0 0.0
        %294 = vmatpush2.msra.mxu0 0.0
        %295 = vmatprep.subr.mxu0 0.0
        %296 = vmatpush2.msra.mxu0 0.0
        %297 = vmatprep.subr.mxu0 0.0
        %298 = vmatpush2.msra.mxu0 0.0
        %299 = vmatprep.subr.mxu0 0.0
        %300 = vmatpush2.msra.mxu0 0.0
        %301 = vmatprep.subr.mxu0 0.0
        %302 = vmatpush2.msra.mxu0 0.0
        %303 = vmatprep.subr.mxu0 0.0
        %304 = vmatpush2.msra.mxu0 0.0
        %305 = vmatprep.subr.mxu0 0.0
        %306 = vmatpush2.msra.mxu0 0.0
        %307 = vmatprep.subr.mxu0 0.0
        %308 = vmatpush2.msra.mxu0 0.0
        %309 = vmatprep.subr.mxu0 0.0
        %310 = vmatpush2.msra.mxu0 0.0
        %311 = vmatprep.subr.mxu0 0.0
        %312 = vmatpush2.msra.mxu0 0.0
        %313 = vmatprep.subr.mxu0 0.0
        %314 = vmatpush2.msra.mxu0 0.0
        %315 = vmatprep.subr.mxu0 0.0
        %316 = vmatpush2.msra.mxu0 0.0
        %317 = vmatprep.subr.mxu0 0.0
        %318 = vmatpush2.msra.mxu0 0.0
        %319 = vmatprep.subr.mxu0 0.0
        %320 = vmatpush2.msra.mxu0 0.0
        %321 = vmatprep.subr.mxu0 0.0
        %322 = vmatpush2.msra.mxu0 0.0
        %323 = vmatprep.subr.mxu0 0.0
        %324 = vmatpush2.msra.mxu0 0.0
        %325 = vmatprep.mubr.f32.mxu0 0.0
        %326 = vmatmul.mubr.f32.gmra.mxu0 %v256
        %v327 = vpop.f32.mrf.mxu0
        %v328 = vadd.f32 0.0, %v327
        %v329 = vpop.f32.mrf.mxu0
        %330 = vmatprep.mubr.f32.mxu0 0.0
        %331 = vmatmul.mubr.f32.gmra.mxu0 %v259
        %v332 = vpop.f32.mrf.mxu0
        %v333 = vadd.f32 0.0, %v332
        %v334 = vpop.f32.mrf.mxu0
        %335 = vdwg.mxu0
        %v336 = vadd.f32 %v249, %v328
        %v337 = vadd.f32 %v250, %v333
        %vm338 = vcmask 261120
        %339 = vst.msk [vmem:[#allocation2] sm:$0xff] %vm338, %v336
        %340 = vst.msk [vmem:[#allocation2 + $0x8] sm:$0xff] %vm338, %v337
        %p341 = scmp.eq.s32.totalorder %s22, 3
        // Predicated region
        $region37: #{multi_head_attention.9} parent=31 // pred_check
          %p342 = pneg %p341
        $region38: #{multi_head_attention.9} parent=31 // pred_check_branch
          %344 = sbr.rel (%p342) target = $region40
        $region39: #{multi_head_attention.9} parent=31 // pred_region
          %v345 = vld [vmem:[#allocation2] sm:$0xff]
          %v346 = vld [vmem:[#allocation2 + $0x8] sm:$0xff]
          %v347 = vld [vmem:[%s240] sm:$0x1]
          %v349 = vlaneseq
          %v350 = vshrl.u32 %v349, 7
          %v351 = vsub.s32 0, %v350
          %v352 = vrot.slane %v347, %v351
          %v354 = vadd.f32 %v345, %v352
          %v355 = vadd.f32 %v346, %v352
          %356 = vst.msk [vmem:[#allocation3] sm:$0xff] %vm338, %v354
          %357 = vst.msk [vmem:[#allocation3 + $0x8] sm:$0xff] %vm338, %v355
        $region40: #{multi_head_attention.9} parent=31 // pred_fallthru
          _
        // Predicated region
        $region41: #{multi_head_attention.9} parent=31 // pred_check
          %p358 = pneg %p136
        $region42: #{multi_head_attention.9} parent=31 // pred_check_branch
          %360 = sbr.rel (%p358) target = $region44
        $region43: #{multi_head_attention.9} parent=31 // pred_region
          %s361 = smul.u32 2, %s20
          %s363 = ssub.s32 256, 256
          %364 = vsyncadd [#allocation4], %s363
          %s365 = sadd.s32 %s21, %s361
          %s366 = smul.addr %s365, 128
          %s367 = scalar_lea.hbm %s3, %s366
          %s368 = sshll.u32 [#allocation3], 4
          %s369 = int_to_ptr.vmem [resolvable:$true] %s368
          %374 = dma.vmem_to_hbm [thread:$0]  %s369, 256, %s367, [#allocation4], 128, 128, 8
        $region44: #{multi_head_attention.9} parent=31 // pred_fallthru
          _
        // Predicated region
        $region45: #{multi_head_attention.9} parent=31 // pred_check
          %p375 = pneg %p136
        $region46: #{multi_head_attention.9} parent=31 // pred_check_branch
          %377 = sbr.rel (%p375) target = $region48
        $region47: #{multi_head_attention.9} parent=31 // pred_region
          %378 = dma.done [#allocation4], 256
        $region48: #{multi_head_attention.9} parent=31 // pred_fallthru
          _
      $region32: #{multi_head_attention.9} parent=5 // pred_fallthru
        _
      %p379 = scmp.le.s32.totalorder 2, %s10
      // Predicated region
      $region49: #{multi_head_attention.9} parent=5 // pred_check
        %p380 = pneg %p379
      $region50: #{multi_head_attention.9} parent=5 // pred_check_branch
        %382 = sbr.rel (%p380) target = $region52
      $region51: #{multi_head_attention.9} parent=5 // pred_region
        %s383 = ssub.s32 %s10, 2
      $region52: #{multi_head_attention.9} parent=5 // pred_fallthru
        _
    $region6: #{multi_head_attention.9} parent=1 // loop_footer
      %s14 = sadd.s32 1, %s10
    $region7: #{multi_head_attention.9} parent=1 // loop_footer_branch
      %9 = sbr.rel target = $region3
    $region8: #{multi_head_attention.9} parent=1 // loop_exit
      _
    %384 = vsyncpa [#allocation4], 1
    %s385 = scalar_lea.sflag [#allocation4], 1
    %386 = vsyncpa %s385, 1

</llo_original>
